<compile_context>
chip_gen: v7x
topology: tpu7x:2x2x1
jax: 0.10.0
libtpu: 0.0.40
codegen_flags: <defaults>
</compile_context>

<pallas_src>
import functools

import jax
import jax.numpy as jnp
from jax.experimental import pallas as pl
from jax.experimental.pallas import tpu as pltpu

# ---------------------------------------------------------------------------
# "opt" configuration (synthetic, deterministic)
# ---------------------------------------------------------------------------
ARCH = "multifeature_bninception_frozen_normalize"   # contains 'normalize' & 'frozen'
EMBED_DIM = 32
FEATURE_DIM = 1024                                   # bninception last_linear.in_features
DIVA_FEATURES = ("discriminative", "selfsimilarity", "shared", "intra")

_VMEM_LIMIT = 48 * 1024 * 1024   # < v7x 64 MiB physical, > v5e 16 MiB default scoped limit


def _round_up(x, m):
    return (x + m - 1) // m * m


def _pick_pool_tile(hw, target=1024):
    """Largest multiple-of-8 divisor of hw that is <= target (whole plane fallback)."""
    cands = [d for d in range(8, min(hw, target) + 1, 8) if hw % d == 0]
    return max(cands) if cands else hw


# ---------------------------------------------------------------------------
# Kernel 1: fused stem conv (im2col matmul, BN + bias folded) + ReLU
#           + global average pool (f32 accumulation in the output block)
# ---------------------------------------------------------------------------
def stem_pool_kernel(p_ref, w_ref, pooled_ref, *, inv_hw):
    # p_ref:      (1, TM, Kp) bf16 im2col patches (ones column appended -> bias folded)
    # w_ref:      (Kp, C)     bf16 conv weights (frozen-BN scale folded, BN shift last row)
    # pooled_ref: (1, 1, C)   f32 accumulator output, resident across the row-tile axis
    t = pl.program_id(1)

    @pl.when(t == 0)
    def _():
        pooled_ref[...] = jnp.zeros_like(pooled_ref)

    y = jnp.dot(p_ref[0], w_ref[...], preferred_element_type=jnp.float32)
    y = jnp.maximum(y, 0.0)                                   # ReLU
    pooled_ref[0] += jnp.sum(y, axis=0, keepdims=True)        # f32 spatial-sum accumulate

    @pl.when(t == pl.num_programs(1) - 1)
    def _():
        pooled_ref[...] = pooled_ref[...] * inv_hw            # sum -> mean on the last tile


def stem_conv_pool(x_nhwc, w, gamma, beta, mean, var, eps=1e-5):
    """3x3/s1/p1 conv -> frozen BN (folded) -> ReLU -> global average pool, fully fused."""
    N, H, W, Cin = x_nhwc.shape
    kh = kw = 3
    Cout = w.shape[-1]
    HW = H * W

    # Fold eval-mode BN into the conv weight, and fold the BN shift (bias) into the
    # matmul as an extra weight row matched by a ones column in the patches.
    scale = gamma * jax.lax.rsqrt(var + eps)                          # (Cout,)
    shift = beta - mean * scale                                       # (Cout,)
    w2 = (w * scale).reshape(kh * kw * Cin, Cout)
    w_aug = jnp.concatenate([w2, shift[None, :]], axis=0)             # (27+1, Cout)

    K = kh * kw * Cin + 1
    Kp = _round_up(K, 8)                                              # 28 -> 32 aligned

    # im2col glue (plain JAX).  With Cin=3 the patch stream is tiny next to the pooled
    # output; TODO(synk): at real backbone sizes build the 9-tap patches inside the
    # kernel from the raw NHWC tile (9 pl.ds-shifted reads) instead of materializing.
    xp = jnp.pad(x_nhwc, ((0, 0), (1, 1), (1, 1), (0, 0)))
    patches = jnp.concatenate(
        [xp[:, i:i + H, j:j + W, :] for i in range(kh) for j in range(kw)], axis=-1)
    patches = jnp.concatenate([patches, jnp.ones((N, H, W, 1), patches.dtype)], axis=-1)
    patches = patches.reshape(N, HW, K)
    patches = jnp.pad(patches, ((0, 0), (0, 0), (0, Kp - K))).astype(jnp.bfloat16)
    w_aug = jnp.pad(w_aug, ((0, Kp - K), (0, 0))).astype(jnp.bfloat16)

    tm = _pick_pool_tile(HW)          # divides HW -> no padded rows pollute the mean
    n_tiles = HW // tm

    pooled = pl.pallas_call(
        functools.partial(stem_pool_kernel, inv_hw=1.0 / HW),
        out_shape=jax.ShapeDtypeStruct((N, 1, Cout), jnp.float32),
        grid=(N, n_tiles),
        in_specs=[
            pl.BlockSpec((1, tm, Kp), lambda n, t: (n, t, 0)),
            pl.BlockSpec((Kp, Cout), lambda n, t: (0, 0)),    # weights resident
        ],
        out_specs=pl.BlockSpec((1, 1, Cout), lambda n, t: (n, 0, 0)),
        compiler_params=pltpu.CompilerParams(
            dimension_semantics=("parallel", "arbitrary"),
            vmem_limit_bytes=_VMEM_LIMIT),
    )(patches, w_aug)
    return pooled[:, 0, :]                                            # (N, Cout) f32


# ---------------------------------------------------------------------------
# Kernel 2: fused multi-head linear (+ per-head L2 normalize) on the pooled vector
# ---------------------------------------------------------------------------
def heads_kernel(pooled_ref, w_ref, b_ref, mask_ref, emb_ref, *, normalize):
    # pooled_ref: (TN, C)       f32
    # w_ref:      (C, nH*D)     bf16  (all heads concatenated -> lane-dense 128-wide output)
    # b_ref:      (1, nH*D)     f32
    # mask_ref:   (nH*D, nH*D)  f32   block-diagonal head mask (per-head sum-of-squares via MXU)
    # emb_ref:    (TN, nH*D)    f32
    emb = jnp.dot(pooled_ref[...].astype(jnp.bfloat16), w_ref[...],
                  preferred_element_type=jnp.float32) + b_ref[...]
    if normalize:
        # per-head sum of squares, broadcast back onto every lane of its head via the mask matmul
        ssq = jnp.dot(emb * emb, mask_ref[...], preferred_element_type=jnp.float32)
        # F.normalize: x / max(||x||, 1e-12)  ==  x * rsqrt(max(||x||^2, 1e-24))
        emb = emb * jax.lax.rsqrt(jnp.maximum(ssq, 1e-24))
    emb_ref[...] = emb


def heads(pooled, head_w, head_b, normalize):
    N, C = pooled.shape
    nH, _, D = head_w.shape
    HD = nH * D

    # Batch tile: whole batch when small (block == full dim is always legal), else
    # 8-row sublane-dense tiles -> unmasked stores, few grid steps.  After the pool
    # fusion this kernel touches only O(N*KB) of HBM, so megacore split is moot.
    tn = N if N <= 8 else 8
    Np = _round_up(N, tn)
    pooled_p = jnp.pad(pooled, ((0, Np - N), (0, 0)))

    w_cat = jnp.moveaxis(head_w, 0, 1).reshape(C, HD).astype(jnp.bfloat16)
    b_cat = head_b.reshape(1, HD).astype(jnp.float32)
    mask = jnp.kron(jnp.eye(nH, dtype=jnp.float32), jnp.ones((D, D), jnp.float32))

    emb = pl.pallas_call(
        functools.partial(heads_kernel, normalize=normalize),
        out_shape=jax.ShapeDtypeStruct((Np, HD), jnp.float32),
        grid=(Np // tn,),
        in_specs=[
            pl.BlockSpec((tn, C), lambda i: (i, 0)),
            pl.BlockSpec((C, HD), lambda i: (0, 0)),
            pl.BlockSpec((1, HD), lambda i: (0, 0)),
            pl.BlockSpec((HD, HD), lambda i: (0, 0)),
        ],
        out_specs=pl.BlockSpec((tn, HD), lambda i: (i, 0)),
        compiler_params=pltpu.CompilerParams(
            dimension_semantics=("parallel",),
            vmem_limit_bytes=_VMEM_LIMIT),
    )(pooled_p, w_cat, b_cat, mask)
    return emb[:N]


# ---------------------------------------------------------------------------
# Full forward
# ---------------------------------------------------------------------------
def network_forward(x_nchw, params):
    x = jnp.transpose(x_nchw, (0, 2, 3, 1))                           # NCHW -> NHWC
    # TODO(synk): the full BN-Inception backbone (stem 7x7 + inception 3a..5b) is not
    # replicated; a single fused conv3x3 + frozen-BN + ReLU stem producing FEATURE_DIM
    # channels stands in for `self.model.features(x)`.
    # TODO(synk): avg_pool2d(kernel_size=H) differs from a full-plane mean when H != W.
    pooled = stem_conv_pool(x, params["stem_w"], params["bn_gamma"], params["bn_beta"],
                            params["bn_mean"], params["bn_var"])
    emb_all = heads(pooled, params["head_w"], params["head_b"],
                    normalize=("normalize" in ARCH))
    D = EMBED_DIM
    out_dict = {k: emb_all[:, i * D:(i + 1) * D] for i, k in enumerate(DIVA_FEATURES)}
    return out_dict, pooled


def init_params(key, in_channels=3):
    ks = jax.random.split(key, 7)
    nH = len(DIVA_FEATURES)
    return {
        "stem_w": 0.05 * jax.random.normal(ks[0], (3, 3, in_channels, FEATURE_DIM), jnp.float32),
        "bn_gamma": 1.0 + 0.1 * jax.random.normal(ks[1], (FEATURE_DIM,), jnp.float32),
        "bn_beta": 0.1 * jax.random.normal(ks[2], (FEATURE_DIM,), jnp.float32),
        "bn_mean": 0.1 * jax.random.normal(ks[3], (FEATURE_DIM,), jnp.float32),
        "bn_var": jnp.abs(jax.random.normal(ks[4], (FEATURE_DIM,), jnp.float32)) + 0.5,
        "head_w": jax.random.normal(ks[5], (nH, FEATURE_DIM, EMBED_DIM), jnp.float32)
                  / jnp.sqrt(FEATURE_DIM).astype(jnp.float32),
        "head_b": 0.01 * jax.random.normal(ks[6], (nH, 1, EMBED_DIM), jnp.float32),
    }


if __name__ == "__main__":
    key = jax.random.PRNGKey(0)
    k_param, k_x = jax.random.split(key)
    params = init_params(k_param, in_channels=3)
    x = jax.random.normal(k_x, (2, 3, 16, 16), jnp.float32)           # NCHW, like PyTorch

    out_dict, pooled = jax.jit(network_forward)(x, params)
    jax.block_until_ready((out_dict, pooled))

    assert pooled.shape == (2, FEATURE_DIM)
    assert set(out_dict.keys()) == set(DIVA_FEATURES)
    assert all(v.shape == (2, EMBED_DIM) for v in out_dict.values())
    if "normalize" in ARCH:
        for v in out_dict.values():
            nrm = jnp.linalg.norm(v, axis=-1)
            assert bool(jnp.all(jnp.abs(nrm - 1.0) < 1e-2))
    print("KERNEL_OK")
</pallas_src>

<mosaic_0001>
module attributes {stable_mosaic.version = 11 : i64} {
  func.func @stem_pool_kernel(%arg0: i32, %arg1: i32, %arg2: memref<1x256x32xbf16, #tpu.memory_space<vmem>>, %arg3: memref<32x1024xbf16, #tpu.memory_space<vmem>>, %arg4: memref<1x1x1024xf32, #tpu.memory_space<vmem>>) attributes {dimension_semantics = [#tpu.dimension_semantics<parallel>, #tpu.dimension_semantics<arbitrary>], iteration_bounds = array<i64: 2, 1>, scalar_prefetch = 0 : i64, scratch_operands = 0 : i64, tpu.core_type = #tpu.core_type<tc>, window_params = [{transform_indices = @transform_0, window_bounds = array<i64: 1, 256, 32>}, {pipeline_mode = #tpu.pipeline_mode<synchronous>, transform_indices = @transform_1, window_bounds = array<i64: 32, 1024>}, {transform_indices = @transform_2, window_bounds = array<i64: 1, 1, 1024>}]} {
    %c0_i32 = arith.constant 0 : i32
    %0 = arith.cmpi eq, %arg1, %c0_i32 : i32
    %1 = arith.extui %0 : i1 to i32
    %c0_i32_0 = arith.constant 0 : i32
    %2 = arith.cmpi ne, %1, %c0_i32_0 : i32
    scf.if %2 {
      %cst_15 = arith.constant 0.000000e+00 : f32
      %20 = vector.broadcast %cst_15 : f32 to vector<1x1x1024xf32>
      %c0_16 = arith.constant 0 : index
      %c0_17 = arith.constant 0 : index
      %c0_18 = arith.constant 0 : index
      %21 = vector.load %arg4[%c0_16, %c0_17, %c0_18] : memref<1x1x1024xf32, #tpu.memory_space<vmem>>, vector<1x1x1024xf32>
      tpu.vector_store %arg4[%c0_16, %c0_17, %c0_18], %20 {strides = array<i32>} : memref<1x1x1024xf32, #tpu.memory_space<vmem>>, vector<1x1x1024xf32>,
    } else {
    }
    %c0 = arith.constant 0 : index
    %c0_1 = arith.constant 0 : index
    %c0_2 = arith.constant 0 : index
    %3 = vector.load %arg2[%c0, %c0_1, %c0_2] : memref<1x256x32xbf16, #tpu.memory_space<vmem>>, vector<1x256x32xbf16>
    %4 = vector.shape_cast %3 : vector<1x256x32xbf16> to vector<256x32xbf16>
    %c0_3 = arith.constant 0 : index
    %c0_4 = arith.constant 0 : index
    %5 = vector.load %arg3[%c0_3, %c0_4] : memref<32x1024xbf16, #tpu.memory_space<vmem>>, vector<32x1024xbf16>
    %cst = arith.constant dense<0.000000e+00> : vector<256x1024xf32>
    %6 = tpu.matmul %4, %5, %cst {dimension_numbers = #tpu.dot_dimension_numbers<[1], [0], [0], [1], [0, 0, 1, 1], [], []>} : vector<256x32xbf16>, vector<32x1024xbf16>, vector<256x1024xf32> -> vector<256x1024xf32>
    %cst_5 = arith.constant 0.000000e+00 : f32
    %7 = vector.broadcast %cst_5 : f32 to vector<256x1024xf32>
    %8 = arith.maximumf %6, %7 : vector<256x1024xf32>
    %c0_6 = arith.constant 0 : index
    %c0_7 = arith.constant 0 : index
    %c0_8 = arith.constant 0 : index
    %9 = vector.load %arg4[%c0_6, %c0_7, %c0_8] : memref<1x1x1024xf32, #tpu.memory_space<vmem>>, vector<1x1x1024xf32>
    %10 = vector.shape_cast %9 : vector<1x1x1024xf32> to vector<1x1024xf32>
    %cst_9 = arith.constant dense<0.000000e+00> : vector<1024xf32>
    %11 = vector.multi_reduction <add>, %8, %cst_9 [0] : vector<256x1024xf32> to vector<1024xf32>
    %12 = vector.shape_cast %11 : vector<1024xf32> to vector<1x1024xf32>
    %13 = arith.addf %10, %12 : vector<1x1024xf32>
    %c0_10 = arith.constant 0 : index
    %c0_11 = arith.constant 0 : index
    %c0_12 = arith.constant 0 : index
    %14 = vector.load %arg4[%c0_10, %c0_11, %c0_12] : memref<1x1x1024xf32, #tpu.memory_space<vmem>>, vector<1x1x1024xf32>
    %15 = vector.shape_cast %14 : vector<1x1x1024xf32> to vector<1x1024xf32>
    %16 = vector.shape_cast %13 : vector<1x1024xf32> to vector<1x1x1024xf32>
    tpu.vector_store %arg4[%c0_10, %c0_11, %c0_12], %16 {strides = array<i32>} : memref<1x1x1024xf32, #tpu.memory_space<vmem>>, vector<1x1x1024xf32>,
    %c0_i32_13 = arith.constant 0 : i32
    %17 = arith.cmpi eq, %arg1, %c0_i32_13 : i32
    %18 = arith.extui %17 : i1 to i32
    %c0_i32_14 = arith.constant 0 : i32
    %19 = arith.cmpi ne, %18, %c0_i32_14 : i32
    scf.if %19 {
      %c0_15 = arith.constant 0 : index
      %c0_16 = arith.constant 0 : index
      %c0_17 = arith.constant 0 : index
      %20 = vector.load %arg4[%c0_15, %c0_16, %c0_17] : memref<1x1x1024xf32, #tpu.memory_space<vmem>>, vector<1x1x1024xf32>
      %cst_18 = arith.constant 3.906250e-03 : f32
      %21 = vector.broadcast %cst_18 : f32 to vector<1x1x1024xf32>
      %22 = arith.mulf %20, %21 : vector<1x1x1024xf32>
      %c0_19 = arith.constant 0 : index
      %c0_20 = arith.constant 0 : index
      %c0_21 = arith.constant 0 : index
      %23 = vector.load %arg4[%c0_19, %c0_20, %c0_21] : memref<1x1x1024xf32, #tpu.memory_space<vmem>>, vector<1x1x1024xf32>
      tpu.vector_store %arg4[%c0_19, %c0_20, %c0_21], %22 {strides = array<i32>} : memref<1x1x1024xf32, #tpu.memory_space<vmem>>, vector<1x1x1024xf32>,
    } else {
    }
    return
  }
  func.func @transform_0(%arg0: i32, %arg1: i32) -> (i32, i32, i32) {
    %c0_i32 = arith.constant 0 : i32
    %c0_i32_0 = arith.constant 0 : i32
    return %arg0, %arg1, %c0_i32 : i32, i32, i32
  }
  func.func @transform_1(%arg0: i32, %arg1: i32) -> (i32, i32) {
    %c0_i32 = arith.constant 0 : i32
    %c0_i32_0 = arith.constant 0 : i32
    %c0_i32_1 = arith.constant 0 : i32
    return %c0_i32, %c0_i32_0 : i32, i32
  }
  func.func @transform_2(%arg0: i32, %arg1: i32) -> (i32, i32, i32) {
    %c0_i32 = arith.constant 0 : i32
    %c0_i32_0 = arith.constant 0 : i32
    %c0_i32_1 = arith.constant 0 : i32
    return %arg0, %c0_i32, %c0_i32_0 : i32, i32, i32
  }
}

module attributes {stable_mosaic.version = 11 : i64} {
  func.func @heads_kernel(%arg0: i32, %arg1: memref<2x1024xf32, #tpu.memory_space<vmem>>, %arg2: memref<1024x128xbf16, #tpu.memory_space<vmem>>, %arg3: memref<1x128xf32, #tpu.memory_space<vmem>>, %arg4: memref<128x128xf32, #tpu.memory_space<vmem>>, %arg5: memref<2x128xf32, #tpu.memory_space<vmem>>) attributes {dimension_semantics = [#tpu.dimension_semantics<parallel>], iteration_bounds = array<i64: 1>, scalar_prefetch = 0 : i64, scratch_operands = 0 : i64, tpu.core_type = #tpu.core_type<tc>, window_params = [{transform_indices = @transform_0, window_bounds = array<i64: 2, 1024>}, {pipeline_mode = #tpu.pipeline_mode<synchronous>, transform_indices = @transform_1, window_bounds = array<i64: 1024, 128>}, {pipeline_mode = #tpu.pipeline_mode<synchronous>, transform_indices = @transform_2, window_bounds = array<i64: 1, 128>}, {pipeline_mode = #tpu.pipeline_mode<synchronous>, transform_indices = @transform_3, window_bounds = array<i64: 128, 128>}, {transform_indices = @transform_4, window_bounds = array<i64: 2, 128>}]} {
    %c0 = arith.constant 0 : index
    %c0_0 = arith.constant 0 : index
    %0 = vector.load %arg1[%c0, %c0_0] : memref<2x1024xf32, #tpu.memory_space<vmem>>, vector<2x1024xf32>
    %1 = arith.truncf %0 : vector<2x1024xf32> to vector<2x1024xbf16>
    %c0_1 = arith.constant 0 : index
    %c0_2 = arith.constant 0 : index
    %2 = vector.load %arg2[%c0_1, %c0_2] : memref<1024x128xbf16, #tpu.memory_space<vmem>>, vector<1024x128xbf16>
    %cst = arith.constant dense<0.000000e+00> : vector<2x128xf32>
    %3 = tpu.matmul %1, %2, %cst {dimension_numbers = #tpu.dot_dimension_numbers<[1], [0], [0], [1], [0, 0, 1, 1], [], []>} : vector<2x1024xbf16>, vector<1024x128xbf16>, vector<2x128xf32> -> vector<2x128xf32>
    %c0_3 = arith.constant 0 : index
    %c0_4 = arith.constant 0 : index
    %4 = vector.load %arg3[%c0_3, %c0_4] : memref<1x128xf32, #tpu.memory_space<vmem>>, vector<1x128xf32>
    %5 = vector.broadcast %4 : vector<1x128xf32> to vector<2x128xf32>
    %6 = arith.addf %3, %5 : vector<2x128xf32>
    %7 = arith.mulf %6, %6 : vector<2x128xf32>
    %c0_5 = arith.constant 0 : index
    %c0_6 = arith.constant 0 : index
    %8 = vector.load %arg4[%c0_5, %c0_6] : memref<128x128xf32, #tpu.memory_space<vmem>>, vector<128x128xf32>
    %cst_7 = arith.constant dense<0.000000e+00> : vector<2x128xf32>
    %9 = tpu.matmul %7, %8, %cst_7 {dimension_numbers = #tpu.dot_dimension_numbers<[1], [0], [0], [1], [0, 0, 1, 1], [], []>} : vector<2x128xf32>, vector<128x128xf32>, vector<2x128xf32> -> vector<2x128xf32>
    %cst_8 = arith.constant 1.000000e-24 : f32
    %10 = vector.broadcast %cst_8 : f32 to vector<2x128xf32>
    %11 = arith.maximumf %9, %10 : vector<2x128xf32>
    %12 = math.rsqrt %11 : vector<2x128xf32>
    %13 = arith.mulf %6, %12 : vector<2x128xf32>
    %c0_9 = arith.constant 0 : index
    %c0_10 = arith.constant 0 : index
    %14 = vector.load %arg5[%c0_9, %c0_10] : memref<2x128xf32, #tpu.memory_space<vmem>>, vector<2x128xf32>
    tpu.vector_store %arg5[%c0_9, %c0_10], %13 {strides = array<i32>} : memref<2x128xf32, #tpu.memory_space<vmem>>, vector<2x128xf32>,
    return
  }
  func.func @transform_0(%arg0: i32) -> (i32, i32) {
    %c0_i32 = arith.constant 0 : i32
    %c0_i32_0 = arith.constant 0 : i32
    return %arg0, %c0_i32 : i32, i32
  }
  func.func @transform_1(%arg0: i32) -> (i32, i32) {
    %c0_i32 = arith.constant 0 : i32
    %c0_i32_0 = arith.constant 0 : i32
    %c0_i32_1 = arith.constant 0 : i32
    return %c0_i32, %c0_i32_0 : i32, i32
  }
  func.func @transform_2(%arg0: i32) -> (i32, i32) {
    %c0_i32 = arith.constant 0 : i32
    %c0_i32_0 = arith.constant 0 : i32
    %c0_i32_1 = arith.constant 0 : i32
    return %c0_i32, %c0_i32_0 : i32, i32
  }
  func.func @transform_3(%arg0: i32) -> (i32, i32) {
    %c0_i32 = arith.constant 0 : i32
    %c0_i32_0 = arith.constant 0 : i32
    %c0_i32_1 = arith.constant 0 : i32
    return %c0_i32, %c0_i32_0 : i32, i32
  }
  func.func @transform_4(%arg0: i32) -> (i32, i32) {
    %c0_i32 = arith.constant 0 : i32
    %c0_i32_0 = arith.constant 0 : i32
    return %arg0, %c0_i32 : i32, i32
  }
}

</mosaic_0001>

<llo_original>
// kernel: network_forward.2
$region0: #{network_forward.2}
  #allocation0 [shape = 'u32[]', space=smem, size = 0x4, offset = 0x4, fixed_abs, tag = 'smem constant byte address 0x4 - core index']
  #allocation1 [shape = 'u32[144,128]{1,0:T(1,128)}', space=vmem, size = 0x12000, scoped, tag = 'internal scratch']
  %s0 = inlined_call_operand.vmem [shape: bf16[2,256,32], index: 0, kind: input, shape index: {}]
  %s1 = inlined_call_operand.vmem [shape: bf16[32,1024], index: 1, kind: input, shape index: {}]
  %s2 = inlined_call_operand.vmem [shape: f32[2,1,1024], index: 2, kind: output, shape index: {}]
  %s3 = sld [smem:[#allocation0]]
  $region49: #{network_forward.2} parent=0
    _
  %s5 = ssub.s32 1, %s3
  %s6 = scalar_select 0, %s5, %s3
  loop: start=0, step=1, limit=4
  $region2: #{network_forward.2} parent=0 // loop_pre_header
    _
  $region3: #{network_forward.2} parent=0 // loop_header
    %s8 = sphi 0, %s12
    %p9 = scmp.ge.s32.totalorder %s8, 4
    %s15 = sphi 0, %s27
    %s16 = sphi 0, %s23
    %s17 = sphi 0, %s15
    %s18 = sphi 0, %s16
    %s19 = sphi 0, %s17
    %s20 = sphi 0, %s18
    %s32 = sphi 0, %s34
    %s35 = sphi 0, %s32
    %s36 = sphi 0, %s35
    %s52 = sphi 0, %s36
    %s56 = sphi 0, %s56
    %s58 = sphi 0, %s56
    %s59 = sphi 0, %s58
    %s73 = sphi 0, %s59
    %s79 = sphi 0, %s81
    %s82 = sphi 0, %s79
    %s83 = sphi 0, %s82
    %s99 = sphi 0, %s83
  $region4: #{network_forward.2} parent=0 // loop_header_branch
    %11 = sbr.rel (%p9) target = $region8
  $region5: #{network_forward.2} parent=0 // loop_body
    %s13 = ssub.s32 %s8, 1
    %s14 = ssub.s32 %s8, 2
    %s21 = sadd.s32 1, %s16
    %p22 = scmp.ge.s32.totalorder %s21, 1
    %s23 = scalar_select %p22, 0, %s21
    %s24 = sadd.s32 1, %s15
    %s25 = scalar_select %p22, %s24, %s15
    %p26 = scmp.ge.s32.totalorder %s25, 2
    %s27 = scalar_select %p26, 0, %s25
    %s28 = ssub.s32 %s15, %s27
    %s29 = ssub.s32 %s16, %s23
    %s30 = sor.u32 %s28, %s29
    %p31 = scmp.eq.s32.totalorder %s30, 0
    %s33 = sadd.s32 %s32, 1
    %s34 = scalar_select %p31, %s32, %s33
    %p37 = pneg %p31
    %p38 = scmp.eq.s32.totalorder %s8, 1
    %p39 = por %p37, %p38
    %p40 = scmp.ne.s32.totalorder %s32, %s35
    %p41 = scmp.eq.s32.totalorder %s8, 0
    %p42 = por %p40, %p41
    %p43 = scmp.ne.s32.totalorder %s32, %s35
    %p44 = scmp.eq.s32.totalorder %s13, 1
    %p45 = por %p43, %p44
    %p46 = scmp.ne.s32.totalorder %s35, %s36
    %p47 = scmp.eq.s32.totalorder %s13, 0
    %p48 = por %p46, %p47
    %p49 = scmp.ne.s32.totalorder %s35, %s36
    %p50 = scmp.eq.s32.totalorder %s14, 1
    %p51 = por %p49, %p50
    %p53 = scmp.ne.s32.totalorder %s36, %s52
    %p54 = scmp.eq.s32.totalorder %s14, 0
    %p55 = por %p53, %p54
    %s57 = sadd.s32 %s56, 1
    %p60 = scmp.eq.s32.totalorder %s8, 1
    %p61 = scmp.ne.s32.totalorder %s56, %s58
    %p62 = scmp.eq.s32.totalorder %s8, 0
    %p63 = por %p61, %p62
    %p64 = scmp.ne.s32.totalorder %s56, %s58
    %p65 = scmp.eq.s32.totalorder %s13, 1
    %p66 = por %p64, %p65
    %p67 = scmp.ne.s32.totalorder %s58, %s59
    %p68 = scmp.eq.s32.totalorder %s13, 0
    %p69 = por %p67, %p68
    %p70 = scmp.ne.s32.totalorder %s58, %s59
    %p71 = scmp.eq.s32.totalorder %s14, 1
    %p72 = por %p70, %p71
    %p74 = scmp.ne.s32.totalorder %s59, %s73
    %p75 = scmp.eq.s32.totalorder %s14, 0
    %p76 = por %p74, %p75
    %s77 = ssub.s32 %s15, %s27
    %p78 = scmp.eq.s32.totalorder %s77, 0
    %s80 = sadd.s32 %s79, 1
    %s81 = scalar_select %p78, %s79, %s80
    %p84 = pneg %p78
    %p85 = scmp.eq.s32.totalorder %s8, 1
    %p86 = por %p84, %p85
    %p87 = scmp.ne.s32.totalorder %s79, %s82
    %p88 = scmp.eq.s32.totalorder %s8, 0
    %p89 = por %p87, %p88
    %p90 = scmp.ne.s32.totalorder %s79, %s82
    %p91 = scmp.eq.s32.totalorder %s13, 1
    %p92 = por %p90, %p91
    %p93 = scmp.ne.s32.totalorder %s82, %s83
    %p94 = scmp.eq.s32.totalorder %s13, 0
    %p95 = por %p93, %p94
    %p96 = scmp.ne.s32.totalorder %s82, %s83
    %p97 = scmp.eq.s32.totalorder %s14, 1
    %p98 = por %p96, %p97
    %p100 = scmp.ne.s32.totalorder %s83, %s99
    %p101 = scmp.eq.s32.totalorder %s14, 0
    %p102 = por %p100, %p101
    %p103 = scmp.le.s32.totalorder 1, %s8
    %p104 = scmp.lt.s32.totalorder %s8, 3
    %p105 = pnand %p103, %p104
    %p106 = pneg %p105
    // Predicated region
    $region9: #{network_forward.2} parent=5 // pred_check
      _
    $region10: #{network_forward.2} parent=5 // pred_check_branch
      %108 = sbr.rel (%p105) target = $region12
    $region11: #{network_forward.2} parent=5 // pred_region
      %s109 = ssub.s32 %s8, 1
      // Predicated region
      $region13: #{network_forward.2} parent=11 // pred_check
        %p110 = pneg %p69
      $region14: #{network_forward.2} parent=11 // pred_check_branch
        %112 = sbr.rel (%p110) target = $region16
      $region15: #{network_forward.2} parent=11 // pred_region
        _
      $region16: #{network_forward.2} parent=11 // pred_fallthru
        _
    $region12: #{network_forward.2} parent=5 // pred_fallthru
      _
    %p113 = scmp.lt.s32.totalorder %s8, 2
    // Predicated region
    $region17: #{network_forward.2} parent=5 // pred_check
      %p114 = pneg %p113
    $region18: #{network_forward.2} parent=5 // pred_check_branch
      %116 = sbr.rel (%p114) target = $region20
    $region19: #{network_forward.2} parent=5 // pred_region
      // Predicated region
      $region21: #{network_forward.2} parent=19 // pred_check
        %p117 = pneg %p42
      $region22: #{network_forward.2} parent=19 // pred_check_branch
        %119 = sbr.rel (%p117) target = $region24
      $region23: #{network_forward.2} parent=19 // pred_region
        %s120 = smul.u32 32, %s16
        %p121 = scmp.lt.s32.totalorder %s15, 1
        %s122 = scalar_select %p121, %s15, 1
        %p123 = scmp.lt.s32.totalorder %s120, 31
        %s124 = scalar_select %p123, %s120, 31
        %s125 = smul.addr %s122, 32
        %s126 = sadd.s32 %s124, %s125
        %s127 = smul.addr %s126, 4
        %s128 = scalar_lea.vmem %s0, %s127
        %s129 = smul.u32 32, %s16
      $region24: #{network_forward.2} parent=19 // pred_fallthru
        _
    $region20: #{network_forward.2} parent=5 // pred_fallthru
      _
    %p130 = scmp.le.s32.totalorder 1, %s8
    %p131 = scmp.lt.s32.totalorder %s8, 3
    %p132 = pnand %p130, %p131
    %p133 = pneg %p132
    // Predicated region
    $region25: #{network_forward.2} parent=5 // pred_check
      _
    $region26: #{network_forward.2} parent=5 // pred_check_branch
      %135 = sbr.rel (%p132) target = $region28
    $region27: #{network_forward.2} parent=5 // pred_region
      %s136 = ssub.s32 %s8, 1
      %s137 = smul.u32 32, %s18
      %p138 = scmp.lt.s32.totalorder %s17, 1
      %s139 = scalar_select %p138, %s17, 1
      %p140 = scmp.lt.s32.totalorder %s137, 31
      %s141 = scalar_select %p140, %s137, 31
      %s142 = smul.addr %s139, 32
      %s143 = sadd.s32 %s141, %s142
      %s144 = smul.addr %s143, 4
      %s145 = scalar_lea.vmem %s0, %s144
      %p146 = pneg %p48
      %p147 = pneg %p45
      %p148 = pneg %p69
      %p149 = pneg %p66
      %p150 = pneg %p95
      %p151 = pneg %p92
      %p152 = scmp.lt.s32.totalorder %s17, 1
      %s153 = scalar_select %p152, %s17, 1
      %s154 = smul.addr %s153, 8
      %s155 = scalar_lea.vmem %s2, %s154
      %s156 = smul.u32 32, %s18
      %p157 = scmp.lt.s32.totalorder %s17, 1
      %s158 = scalar_select %p157, %s17, 1
      %p159 = scmp.lt.s32.totalorder %s156, 31
      %s160 = scalar_select %p159, %s156, 31
      %s161 = smul.addr %s158, 32
      %s162 = sadd.s32 %s160, %s161
      %s163 = smul.addr %s162, 4
      %s164 = scalar_lea.vmem %s0, %s163
      %s165 = smul.u32 32, %s18
      %p166 = scmp.lt.s32.totalorder %s17, 1
      %s167 = scalar_select %p166, %s17, 1
      %s168 = smul.addr %s167, 8
      %s169 = scalar_lea.vmem %s2, %s168
      %p171 = scmp.eq.s32.totalorder %s18, 0
      // Predicated region
      $region29: #{network_forward.2} parent=27 // pred_check
        %p172 = pneg %p171
      $region30: #{network_forward.2} parent=27 // pred_check_branch
        %174 = sbr.rel (%p172) target = $region32
      $region31: #{network_forward.2} parent=27 // pred_region
        %175 = vst [vmem:[%s169] sm:$0xff] 0.0
      $region32: #{network_forward.2} parent=27 // pred_fallthru
        _
      %v176 = vld [vmem:[%s164] sm:$0xf]
      %v177 = vld [vmem:[%s164 + $0x4] sm:$0xf]
      %v178 = vld [vmem:[%s164 + $0x8] sm:$0xf]
      %v179 = vld [vmem:[%s164 + $0xc] sm:$0xf]
      %v180 = vld [vmem:[%s164 + $0x10] sm:$0xf]
      %v181 = vld [vmem:[%s164 + $0x14] sm:$0xf]
      %v182 = vld [vmem:[%s164 + $0x18] sm:$0xf]
      %v183 = vld [vmem:[%s164 + $0x1c] sm:$0xf]
      %v184 = vld [vmem:[%s164 + $0x20] sm:$0xf]
      %v185 = vld [vmem:[%s164 + $0x24] sm:$0xf]
      %v186 = vld [vmem:[%s164 + $0x28] sm:$0xf]
      %v187 = vld [vmem:[%s164 + $0x2c] sm:$0xf]
      %v188 = vld [vmem:[%s164 + $0x30] sm:$0xf]
      %v189 = vld [vmem:[%s164 + $0x34] sm:$0xf]
      %v190 = vld [vmem:[%s164 + $0x38] sm:$0xf]
      %v191 = vld [vmem:[%s164 + $0x3c] sm:$0xf]
      %v192 = vld [vmem:[%s164 + $0x40] sm:$0xf]
      %v193 = vld [vmem:[%s164 + $0x44] sm:$0xf]
      %v194 = vld [vmem:[%s164 + $0x48] sm:$0xf]
      %v195 = vld [vmem:[%s164 + $0x4c] sm:$0xf]
      %v196 = vld [vmem:[%s164 + $0x50] sm:$0xf]
      %v197 = vld [vmem:[%s164 + $0x54] sm:$0xf]
      %v198 = vld [vmem:[%s164 + $0x58] sm:$0xf]
      %v199 = vld [vmem:[%s164 + $0x5c] sm:$0xf]
      %v200 = vld [vmem:[%s164 + $0x60] sm:$0xf]
      %v201 = vld [vmem:[%s164 + $0x64] sm:$0xf]
      %v202 = vld [vmem:[%s164 + $0x68] sm:$0xf]
      %v203 = vld [vmem:[%s164 + $0x6c] sm:$0xf]
      %v204 = vld [vmem:[%s164 + $0x70] sm:$0xf]
      %v205 = vld [vmem:[%s164 + $0x74] sm:$0xf]
      %v206 = vld [vmem:[%s164 + $0x78] sm:$0xf]
      %v207 = vld [vmem:[%s164 + $0x7c] sm:$0xf]
      %v208 = vld [vmem:[%s1] sm:$0xff]
      %v209 = vld [vmem:[%s1 + $0x8] sm:$0xff]
      %v210 = vld [vmem:[%s1 + $0x10] sm:$0xff]
      %v211 = vld [vmem:[%s1 + $0x18] sm:$0xff]
      %v212 = vld [vmem:[%s1 + $0x20] sm:$0xff]
      %v213 = vld [vmem:[%s1 + $0x28] sm:$0xff]
      %v214 = vld [vmem:[%s1 + $0x30] sm:$0xff]
      %v215 = vld [vmem:[%s1 + $0x38] sm:$0xff]
      %v216 = vld [vmem:[%s1 + $0x40] sm:$0xff]
      %v217 = vld [vmem:[%s1 + $0x48] sm:$0xff]
      %v218 = vld [vmem:[%s1 + $0x50] sm:$0xff]
      %v219 = vld [vmem:[%s1 + $0x58] sm:$0xff]
      %v220 = vld [vmem:[%s1 + $0x60] sm:$0xff]
      %v221 = vld [vmem:[%s1 + $0x68] sm:$0xff]
      %v222 = vld [vmem:[%s1 + $0x70] sm:$0xff]
      %v223 = vld [vmem:[%s1 + $0x78] sm:$0xff]
      %v256 = vunpack.c.l.b16 %v176
      %v257 = vunpack.c.l.b16 %v177
      %v258 = vunpack.c.l.b16 %v178
      %v259 = vunpack.c.l.b16 %v179
      %v260 = vunpack.c.l.b16 %v180
      %v261 = vunpack.c.l.b16 %v181
      %v262 = vunpack.c.l.b16 %v182
      %v263 = vunpack.c.l.b16 %v183
      %v264 = vunpack.c.l.b16 %v184
      %v265 = vunpack.c.l.b16 %v185
      %v266 = vunpack.c.l.b16 %v186
      %v267 = vunpack.c.l.b16 %v187
      %v268 = vunpack.c.l.b16 %v188
      %v269 = vunpack.c.l.b16 %v189
      %v270 = vunpack.c.l.b16 %v190
      %v271 = vunpack.c.l.b16 %v191
      %v272 = vunpack.c.l.b16 %v192
      %v273 = vunpack.c.l.b16 %v193
      %v274 = vunpack.c.l.b16 %v194
      %v275 = vunpack.c.l.b16 %v195
      %v276 = vunpack.c.l.b16 %v196
      %v277 = vunpack.c.l.b16 %v197
      %v278 = vunpack.c.l.b16 %v198
      %v279 = vunpack.c.l.b16 %v199
      %v280 = vunpack.c.l.b16 %v200
      %v281 = vunpack.c.l.b16 %v201
      %v282 = vunpack.c.l.b16 %v202
      %v283 = vunpack.c.l.b16 %v203
      %v284 = vunpack.c.l.b16 %v204
      %v285 = vunpack.c.l.b16 %v205
      %v286 = vunpack.c.l.b16 %v206
      %v287 = vunpack.c.l.b16 %v207
      %v288 = vpack.c.b16 %v257, %v256
      %v289 = vpack.c.b16 %v259, %v258
      %v290 = vpack.c.b16 %v261, %v260
      %v291 = vpack.c.b16 %v263, %v262
      %v292 = vpack.c.b16 %v265, %v264
      %v293 = vpack.c.b16 %v267, %v266
      %v294 = vpack.c.b16 %v269, %v268
      %v295 = vpack.c.b16 %v271, %v270
      %v296 = vpack.c.b16 %v273, %v272
      %v297 = vpack.c.b16 %v275, %v274
      %v298 = vpack.c.b16 %v277, %v276
      %v299 = vpack.c.b16 %v279, %v278
      %v300 = vpack.c.b16 %v281, %v280
      %v301 = vpack.c.b16 %v283, %v282
      %v302 = vpack.c.b16 %v285, %v284
      %v303 = vpack.c.b16 %v287, %v286
      %v320 = vunpack.c.l.b16 %v208
      %v321 = vunpack.c.h.b16 %v208
      %v322 = vunpack.c.l.b16 %v209
      %v323 = vunpack.c.h.b16 %v209
      %v324 = vunpack.c.l.b16 %v210
      %v325 = vunpack.c.h.b16 %v210
      %v326 = vunpack.c.l.b16 %v211
      %v327 = vunpack.c.h.b16 %v211
      %v328 = vunpack.c.l.b16 %v212
      %v329 = vunpack.c.h.b16 %v212
      %v330 = vunpack.c.l.b16 %v213
      %v331 = vunpack.c.h.b16 %v213
      %v332 = vunpack.c.l.b16 %v214
      %v333 = vunpack.c.h.b16 %v214
      %v334 = vunpack.c.l.b16 %v215
      %v335 = vunpack.c.h.b16 %v215
      %v336 = vunpack.c.l.b16 %v216
      %v337 = vunpack.c.h.b16 %v216
      %v338 = vunpack.c.l.b16 %v217
      %v339 = vunpack.c.h.b16 %v217
      %v340 = vunpack.c.l.b16 %v218
      %v341 = vunpack.c.h.b16 %v218
      %v342 = vunpack.c.l.b16 %v219
      %v343 = vunpack.c.h.b16 %v219
      %v344 = vunpack.c.l.b16 %v220
      %v345 = vunpack.c.h.b16 %v220
      %v346 = vunpack.c.l.b16 %v221
      %v347 = vunpack.c.h.b16 %v221
      %v348 = vunpack.c.l.b16 %v222
      %v349 = vunpack.c.h.b16 %v222
      %v350 = vunpack.c.l.b16 %v223
      %v351 = vunpack.c.h.b16 %v223
      %v352 = vpack.c.b16 %v328, %v320
      %v353 = vpack.c.b16 %v329, %v321
      %v354 = vpack.c.b16 %v330, %v322
      %v355 = vpack.c.b16 %v331, %v323
      %v356 = vpack.c.b16 %v332, %v324
      %v357 = vpack.c.b16 %v333, %v325
      %v358 = vpack.c.b16 %v334, %v326
      %v359 = vpack.c.b16 %v335, %v327
      %v360 = vpack.c.b16 %v344, %v336
      %v361 = vpack.c.b16 %v345, %v337
      %v362 = vpack.c.b16 %v346, %v338
      %v363 = vpack.c.b16 %v347, %v339
      %v364 = vpack.c.b16 %v348, %v340
      %v365 = vpack.c.b16 %v349, %v341
      %v366 = vpack.c.b16 %v350, %v342
      %v367 = vpack.c.b16 %v351, %v343
      %vm384 = vcmask 261120
      %v386 = vsel %vm384, %v288, 0
      %v389 = vsel %vm384, %v289, 0
      %v392 = vsel %vm384, %v290, 0
      %v395 = vsel %vm384, %v291, 0
      %v398 = vsel %vm384, %v292, 0
      %v401 = vsel %vm384, %v293, 0
      %v404 = vsel %vm384, %v294, 0
      %v407 = vsel %vm384, %v295, 0
      %v410 = vsel %vm384, %v296, 0
      %v413 = vsel %vm384, %v297, 0
      %v416 = vsel %vm384, %v298, 0
      %v419 = vsel %vm384, %v299, 0
      %v422 = vsel %vm384, %v300, 0
      %v425 = vsel %vm384, %v301, 0
      %v428 = vsel %vm384, %v302, 0
      %v431 = vsel %vm384, %v303, 0
      %433 = vmatprep.subr.bf16.mxu0 %v353
      %434 = vmatpush1.bf16.msra.mxu0 %v352
      %435 = vmatprep.subr.bf16.mxu0 %v361
      %436 = vmatpush1.bf16.msra.mxu0 %v360
      %437 = vmatprep.subr.bf16.mxu0 0
      %438 = vmatpush1.bf16.msra.mxu0 0
      %439 = vmatprep.subr.bf16.mxu0 0
      %440 = vmatpush1.bf16.msra.mxu0 0
      %441 = vmatprep.subr.bf16.mxu0 0
      %442 = vmatpush1.bf16.msra.mxu0 0
      %443 = vmatprep.subr.bf16.mxu0 0
      %444 = vmatpush1.bf16.msra.mxu0 0
      %445 = vmatprep.subr.bf16.mxu0 0
      %446 = vmatpush1.bf16.msra.mxu0 0
      %447 = vmatprep.subr.bf16.mxu0 0
      %448 = vmatpush1.bf16.msra.mxu0 0
      %449 = vmatprep.subr.bf16.mxu0 0
      %450 = vmatpush1.bf16.msra.mxu0 0
      %451 = vmatprep.subr.bf16.mxu0 0
      %452 = vmatpush1.bf16.msra.mxu0 0
      %453 = vmatprep.subr.bf16.mxu0 0
      %454 = vmatpush1.bf16.msra.mxu0 0
      %455 = vmatprep.subr.bf16.mxu0 0
      %456 = vmatpush1.bf16.msra.mxu0 0
      %457 = vmatprep.subr.bf16.mxu0 0
      %458 = vmatpush1.bf16.msra.mxu0 0
      %459 = vmatprep.subr.bf16.mxu0 0
      %460 = vmatpush1.bf16.msra.mxu0 0
      %461 = vmatprep.subr.bf16.mxu0 0
      %462 = vmatpush1.bf16.msra.mxu0 0
      %463 = vmatprep.subr.bf16.mxu0 0
      %464 = vmatpush1.bf16.msra.mxu0 0
      %465 = vmatprep.mubr.bf16.mxu0 0
      %466 = vmatmul.mubr.bf16.gmra.mrb[0].mxu0 %v386
      %v467 = vpop.f32.mrb[0].mxu0
      %v468 = vadd.f32 0.0, %v467
      %v469 = vpop.f32.mrb[0].mxu0
      %v470 = vadd.f32 0.0, %v469
      %v471 = vpop.f32.mrb[0].mxu0
      %v472 = vadd.f32 0.0, %v471
      %v473 = vpop.f32.mrb[0].mxu0
      %v474 = vadd.f32 0.0, %v473
      %475 = vmatprep.mubr.bf16.mxu0 0
      %476 = vmatmul.mubr.bf16.gmra.mrb[0].mxu0 %v389
      %v477 = vpop.f32.mrb[0].mxu0
      %v478 = vadd.f32 0.0, %v477
      %v479 = vpop.f32.mrb[0].mxu0
      %v480 = vadd.f32 0.0, %v479
      %v481 = vpop.f32.mrb[0].mxu0
      %v482 = vadd.f32 0.0, %v481
      %v483 = vpop.f32.mrb[0].mxu0
      %v484 = vadd.f32 0.0, %v483
      %485 = vmatprep.mubr.bf16.mxu0 0
      %486 = vmatmul.mubr.bf16.gmra.mrb[0].mxu0 %v392
      %v487 = vpop.f32.mrb[0].mxu0
      %v488 = vadd.f32 0.0, %v487
      %v489 = vpop.f32.mrb[0].mxu0
      %v490 = vadd.f32 0.0, %v489
      %v491 = vpop.f32.mrb[0].mxu0
      %v492 = vadd.f32 0.0, %v491
      %v493 = vpop.f32.mrb[0].mxu0
      %v494 = vadd.f32 0.0, %v493
      %495 = vmatprep.mubr.bf16.mxu0 0
      %496 = vmatmul.mubr.bf16.gmra.mrb[0].mxu0 %v395
      %v497 = vpop.f32.mrb[0].mxu0
      %v498 = vadd.f32 0.0, %v497
      %v499 = vpop.f32.mrb[0].mxu0
      %v500 = vadd.f32 0.0, %v499
      %v501 = vpop.f32.mrb[0].mxu0
      %v502 = vadd.f32 0.0, %v501
      %v503 = vpop.f32.mrb[0].mxu0
      %v504 = vadd.f32 0.0, %v503
      %505 = vmatprep.mubr.bf16.mxu0 0
      %506 = vmatmul.mubr.bf16.gmra.mrb[0].mxu0 %v398
      %v507 = vpop.f32.mrb[0].mxu0
      %v508 = vadd.f32 0.0, %v507
      %v509 = vpop.f32.mrb[0].mxu0
      %v510 = vadd.f32 0.0, %v509
      %v511 = vpop.f32.mrb[0].mxu0
      %v512 = vadd.f32 0.0, %v511
      %v513 = vpop.f32.mrb[0].mxu0
      %v514 = vadd.f32 0.0, %v513
      %515 = vmatprep.mubr.bf16.mxu0 0
      %516 = vmatmul.mubr.bf16.gmra.mrb[0].mxu0 %v401
      %v517 = vpop.f32.mrb[0].mxu0
      %v518 = vadd.f32 0.0, %v517
      %v519 = vpop.f32.mrb[0].mxu0
      %v520 = vadd.f32 0.0, %v519
      %v521 = vpop.f32.mrb[0].mxu0
      %v522 = vadd.f32 0.0, %v521
      %v523 = vpop.f32.mrb[0].mxu0
      %v524 = vadd.f32 0.0, %v523
      %525 = vmatprep.mubr.bf16.mxu0 0
      %526 = vmatmul.mubr.bf16.gmra.mrb[0].mxu0 %v404
      %v527 = vpop.f32.mrb[0].mxu0
      %v528 = vadd.f32 0.0, %v527
      %v529 = vpop.f32.mrb[0].mxu0
      %v530 = vadd.f32 0.0, %v529
      %v531 = vpop.f32.mrb[0].mxu0
      %v532 = vadd.f32 0.0, %v531
      %v533 = vpop.f32.mrb[0].mxu0
      %v534 = vadd.f32 0.0, %v533
      %535 = vmatprep.mubr.bf16.mxu0 0
      %536 = vmatmul.mubr.bf16.gmra.mrb[0].mxu0 %v407
      %v537 = vpop.f32.mrb[0].mxu0
      %v538 = vadd.f32 0.0, %v537
      %v539 = vpop.f32.mrb[0].mxu0
      %v540 = vadd.f32 0.0, %v539
      %v541 = vpop.f32.mrb[0].mxu0
      %v542 = vadd.f32 0.0, %v541
      %v543 = vpop.f32.mrb[0].mxu0
      %v544 = vadd.f32 0.0, %v543
      %545 = vmatprep.mubr.bf16.mxu0 0
      %546 = vmatmul.mubr.bf16.gmra.mrb[0].mxu0 %v410
      %v547 = vpop.f32.mrb[0].mxu0
      %v548 = vadd.f32 0.0, %v547
      %v549 = vpop.f32.mrb[0].mxu0
      %v550 = vadd.f32 0.0, %v549
      %v551 = vpop.f32.mrb[0].mxu0
      %v552 = vadd.f32 0.0, %v551
      %v553 = vpop.f32.mrb[0].mxu0
      %v554 = vadd.f32 0.0, %v553
      %555 = vmatprep.mubr.bf16.mxu0 0
      %556 = vmatmul.mubr.bf16.gmra.mrb[0].mxu0 %v413
      %v557 = vpop.f32.mrb[0].mxu0
      %v558 = vadd.f32 0.0, %v557
      %v559 = vpop.f32.mrb[0].mxu0
      %v560 = vadd.f32 0.0, %v559
      %v561 = vpop.f32.mrb[0].mxu0
      %v562 = vadd.f32 0.0, %v561
      %v563 = vpop.f32.mrb[0].mxu0
      %v564 = vadd.f32 0.0, %v563
      %565 = vmatprep.mubr.bf16.mxu0 0
      %566 = vmatmul.mubr.bf16.gmra.mrb[0].mxu0 %v416
      %v567 = vpop.f32.mrb[0].mxu0
      %v568 = vadd.f32 0.0, %v567
      %v569 = vpop.f32.mrb[0].mxu0
      %v570 = vadd.f32 0.0, %v569
      %v571 = vpop.f32.mrb[0].mxu0
      %v572 = vadd.f32 0.0, %v571
      %v573 = vpop.f32.mrb[0].mxu0
      %v574 = vadd.f32 0.0, %v573
      %575 = vmatprep.mubr.bf16.mxu0 0
      %576 = vmatmul.mubr.bf16.gmra.mrb[0].mxu0 %v419
      %v577 = vpop.f32.mrb[0].mxu0
      %v578 = vadd.f32 0.0, %v577
      %v579 = vpop.f32.mrb[0].mxu0
      %v580 = vadd.f32 0.0, %v579
      %v581 = vpop.f32.mrb[0].mxu0
      %v582 = vadd.f32 0.0, %v581
      %v583 = vpop.f32.mrb[0].mxu0
      %v584 = vadd.f32 0.0, %v583
      %585 = vmatprep.mubr.bf16.mxu0 0
      %586 = vmatmul.mubr.bf16.gmra.mrb[0].mxu0 %v422
      %v587 = vpop.f32.mrb[0].mxu0
      %v588 = vadd.f32 0.0, %v587
      %v589 = vpop.f32.mrb[0].mxu0
      %v590 = vadd.f32 0.0, %v589
      %v591 = vpop.f32.mrb[0].mxu0
      %v592 = vadd.f32 0.0, %v591
      %v593 = vpop.f32.mrb[0].mxu0
      %v594 = vadd.f32 0.0, %v593
      %595 = vmatprep.mubr.bf16.mxu0 0
      %596 = vmatmul.mubr.bf16.gmra.mrb[0].mxu0 %v425
      %v597 = vpop.f32.mrb[0].mxu0
      %v598 = vadd.f32 0.0, %v597
      %v599 = vpop.f32.mrb[0].mxu0
      %v600 = vadd.f32 0.0, %v599
      %v601 = vpop.f32.mrb[0].mxu0
      %v602 = vadd.f32 0.0, %v601
      %v603 = vpop.f32.mrb[0].mxu0
      %v604 = vadd.f32 0.0, %v603
      %605 = vmatprep.mubr.bf16.mxu0 0
      %606 = vmatmul.mubr.bf16.gmra.mrb[0].mxu0 %v428
      %v607 = vpop.f32.mrb[0].mxu0
      %v608 = vadd.f32 0.0, %v607
      %v609 = vpop.f32.mrb[0].mxu0
      %v610 = vadd.f32 0.0, %v609
      %v611 = vpop.f32.mrb[0].mxu0
      %v612 = vadd.f32 0.0, %v611
      %v613 = vpop.f32.mrb[0].mxu0
      %v614 = vadd.f32 0.0, %v613
      %615 = vmatprep.mubr.bf16.mxu0 0
      %616 = vmatmul.mubr.bf16.gmra.mrb[0].mxu0 %v431
      %v617 = vpop.f32.mrb[0].mxu0
      %v618 = vadd.f32 0.0, %v617
      %v619 = vpop.f32.mrb[0].mxu0
      %v620 = vadd.f32 0.0, %v619
      %v621 = vpop.f32.mrb[0].mxu0
      %v622 = vadd.f32 0.0, %v621
      %v623 = vpop.f32.mrb[0].mxu0
      %v624 = vadd.f32 0.0, %v623
      %625 = vdwg.mxu0
      %626 = vmatprep.subr.bf16.mxu0 %v355
      %627 = vmatpush1.bf16.msra.mxu0 %v354
      %628 = vmatprep.subr.bf16.mxu0 %v363
      %629 = vmatpush1.bf16.msra.mxu0 %v362
      %630 = vmatprep.subr.bf16.mxu0 0
      %631 = vmatpush1.bf16.msra.mxu0 0
      %632 = vmatprep.subr.bf16.mxu0 0
      %633 = vmatpush1.bf16.msra.mxu0 0
      %634 = vmatprep.subr.bf16.mxu0 0
      %635 = vmatpush1.bf16.msra.mxu0 0
      %636 = vmatprep.subr.bf16.mxu0 0
      %637 = vmatpush1.bf16.msra.mxu0 0
      %638 = vmatprep.subr.bf16.mxu0 0
      %639 = vmatpush1.bf16.msra.mxu0 0
      %640 = vmatprep.subr.bf16.mxu0 0
      %641 = vmatpush1.bf16.msra.mxu0 0
      %642 = vmatprep.subr.bf16.mxu0 0
      %643 = vmatpush1.bf16.msra.mxu0 0
      %644 = vmatprep.subr.bf16.mxu0 0
      %645 = vmatpush1.bf16.msra.mxu0 0
      %646 = vmatprep.subr.bf16.mxu0 0
      %647 = vmatpush1.bf16.msra.mxu0 0
      %648 = vmatprep.subr.bf16.mxu0 0
      %649 = vmatpush1.bf16.msra.mxu0 0
      %650 = vmatprep.subr.bf16.mxu0 0
      %651 = vmatpush1.bf16.msra.mxu0 0
      %652 = vmatprep.subr.bf16.mxu0 0
      %653 = vmatpush1.bf16.msra.mxu0 0
      %654 = vmatprep.subr.bf16.mxu0 0
      %655 = vmatpush1.bf16.msra.mxu0 0
      %656 = vmatprep.subr.bf16.mxu0 0
      %657 = vmatpush1.bf16.msra.mxu0 0
      %658 = vmatprep.mubr.bf16.mxu0 0
      %659 = vmatmul.mubr.bf16.gmra.mrb[0].mxu0 %v386
      %v660 = vpop.f32.mrb[0].mxu0
      %v661 = vadd.f32 0.0, %v660
      %v662 = vpop.f32.mrb[0].mxu0
      %v663 = vadd.f32 0.0, %v662
      %v664 = vpop.f32.mrb[0].mxu0
      %v665 = vadd.f32 0.0, %v664
      %v666 = vpop.f32.mrb[0].mxu0
      %v667 = vadd.f32 0.0, %v666
      %668 = vmatprep.mubr.bf16.mxu0 0
      %669 = vmatmul.mubr.bf16.gmra.mrb[0].mxu0 %v389
      %v670 = vpop.f32.mrb[0].mxu0
      %v671 = vadd.f32 0.0, %v670
      %v672 = vpop.f32.mrb[0].mxu0
      %v673 = vadd.f32 0.0, %v672
      %v674 = vpop.f32.mrb[0].mxu0
      %v675 = vadd.f32 0.0, %v674
      %v676 = vpop.f32.mrb[0].mxu0
      %v677 = vadd.f32 0.0, %v676
      %678 = vmatprep.mubr.bf16.mxu0 0
      %679 = vmatmul.mubr.bf16.gmra.mrb[0].mxu0 %v392
      %v680 = vpop.f32.mrb[0].mxu0
      %v681 = vadd.f32 0.0, %v680
      %v682 = vpop.f32.mrb[0].mxu0
      %v683 = vadd.f32 0.0, %v682
      %v684 = vpop.f32.mrb[0].mxu0
      %v685 = vadd.f32 0.0, %v684
      %v686 = vpop.f32.mrb[0].mxu0
      %v687 = vadd.f32 0.0, %v686
      %688 = vmatprep.mubr.bf16.mxu0 0
      %689 = vmatmul.mubr.bf16.gmra.mrb[0].mxu0 %v395
      %v690 = vpop.f32.mrb[0].mxu0
      %v691 = vadd.f32 0.0, %v690
      %v692 = vpop.f32.mrb[0].mxu0
      %v693 = vadd.f32 0.0, %v692
      %v694 = vpop.f32.mrb[0].mxu0
      %v695 = vadd.f32 0.0, %v694
      %v696 = vpop.f32.mrb[0].mxu0
      %v697 = vadd.f32 0.0, %v696
      %698 = vmatprep.mubr.bf16.mxu0 0
      %699 = vmatmul.mubr.bf16.gmra.mrb[0].mxu0 %v398
      %v700 = vpop.f32.mrb[0].mxu0
      %v701 = vadd.f32 0.0, %v700
      %v702 = vpop.f32.mrb[0].mxu0
      %v703 = vadd.f32 0.0, %v702
      %v704 = vpop.f32.mrb[0].mxu0
      %v705 = vadd.f32 0.0, %v704
      %v706 = vpop.f32.mrb[0].mxu0
      %v707 = vadd.f32 0.0, %v706
      %708 = vmatprep.mubr.bf16.mxu0 0
      %709 = vmatmul.mubr.bf16.gmra.mrb[0].mxu0 %v401
      %v710 = vpop.f32.mrb[0].mxu0
      %v711 = vadd.f32 0.0, %v710
      %v712 = vpop.f32.mrb[0].mxu0
      %v713 = vadd.f32 0.0, %v712
      %v714 = vpop.f32.mrb[0].mxu0
      %v715 = vadd.f32 0.0, %v714
      %v716 = vpop.f32.mrb[0].mxu0
      %v717 = vadd.f32 0.0, %v716
      %718 = vmatprep.mubr.bf16.mxu0 0
      %719 = vmatmul.mubr.bf16.gmra.mrb[0].mxu0 %v404
      %v720 = vpop.f32.mrb[0].mxu0
      %v721 = vadd.f32 0.0, %v720
      %v722 = vpop.f32.mrb[0].mxu0
      %v723 = vadd.f32 0.0, %v722
      %v724 = vpop.f32.mrb[0].mxu0
      %v725 = vadd.f32 0.0, %v724
      %v726 = vpop.f32.mrb[0].mxu0
      %v727 = vadd.f32 0.0, %v726
      %728 = vmatprep.mubr.bf16.mxu0 0
      %729 = vmatmul.mubr.bf16.gmra.mrb[0].mxu0 %v407
      %v730 = vpop.f32.mrb[0].mxu0
      %v731 = vadd.f32 0.0, %v730
      %v732 = vpop.f32.mrb[0].mxu0
      %v733 = vadd.f32 0.0, %v732
      %v734 = vpop.f32.mrb[0].mxu0
      %v735 = vadd.f32 0.0, %v734
      %v736 = vpop.f32.mrb[0].mxu0
      %v737 = vadd.f32 0.0, %v736
      %738 = vmatprep.mubr.bf16.mxu0 0
      %739 = vmatmul.mubr.bf16.gmra.mrb[0].mxu0 %v410
      %v740 = vpop.f32.mrb[0].mxu0
      %v741 = vadd.f32 0.0, %v740
      %v742 = vpop.f32.mrb[0].mxu0
      %v743 = vadd.f32 0.0, %v742
      %v744 = vpop.f32.mrb[0].mxu0
      %v745 = vadd.f32 0.0, %v744
      %v746 = vpop.f32.mrb[0].mxu0
      %v747 = vadd.f32 0.0, %v746
      %748 = vmatprep.mubr.bf16.mxu0 0
      %749 = vmatmul.mubr.bf16.gmra.mrb[0].mxu0 %v413
      %v750 = vpop.f32.mrb[0].mxu0
      %v751 = vadd.f32 0.0, %v750
      %v752 = vpop.f32.mrb[0].mxu0
      %v753 = vadd.f32 0.0, %v752
      %v754 = vpop.f32.mrb[0].mxu0
      %v755 = vadd.f32 0.0, %v754
      %v756 = vpop.f32.mrb[0].mxu0
      %v757 = vadd.f32 0.0, %v756
      %758 = vmatprep.mubr.bf16.mxu0 0
      %759 = vmatmul.mubr.bf16.gmra.mrb[0].mxu0 %v416
      %v760 = vpop.f32.mrb[0].mxu0
      %v761 = vadd.f32 0.0, %v760
      %v762 = vpop.f32.mrb[0].mxu0
      %v763 = vadd.f32 0.0, %v762
      %v764 = vpop.f32.mrb[0].mxu0
      %v765 = vadd.f32 0.0, %v764
      %v766 = vpop.f32.mrb[0].mxu0
      %v767 = vadd.f32 0.0, %v766
      %768 = vmatprep.mubr.bf16.mxu0 0
      %769 = vmatmul.mubr.bf16.gmra.mrb[0].mxu0 %v419
      %v770 = vpop.f32.mrb[0].mxu0
      %v771 = vadd.f32 0.0, %v770
      %v772 = vpop.f32.mrb[0].mxu0
      %v773 = vadd.f32 0.0, %v772
      %v774 = vpop.f32.mrb[0].mxu0
      %v775 = vadd.f32 0.0, %v774
      %v776 = vpop.f32.mrb[0].mxu0
      %v777 = vadd.f32 0.0, %v776
      %778 = vmatprep.mubr.bf16.mxu0 0
      %779 = vmatmul.mubr.bf16.gmra.mrb[0].mxu0 %v422
      %v780 = vpop.f32.mrb[0].mxu0
      %v781 = vadd.f32 0.0, %v780
      %v782 = vpop.f32.mrb[0].mxu0
      %v783 = vadd.f32 0.0, %v782
      %v784 = vpop.f32.mrb[0].mxu0
      %v785 = vadd.f32 0.0, %v784
      %v786 = vpop.f32.mrb[0].mxu0
      %v787 = vadd.f32 0.0, %v786
      %788 = vmatprep.mubr.bf16.mxu0 0
      %789 = vmatmul.mubr.bf16.gmra.mrb[0].mxu0 %v425
      %v790 = vpop.f32.mrb[0].mxu0
      %v791 = vadd.f32 0.0, %v790
      %v792 = vpop.f32.mrb[0].mxu0
      %v793 = vadd.f32 0.0, %v792
      %v794 = vpop.f32.mrb[0].mxu0
      %v795 = vadd.f32 0.0, %v794
      %v796 = vpop.f32.mrb[0].mxu0
      %v797 = vadd.f32 0.0, %v796
      %798 = vmatprep.mubr.bf16.mxu0 0
      %799 = vmatmul.mubr.bf16.gmra.mrb[0].mxu0 %v428
      %v800 = vpop.f32.mrb[0].mxu0
      %v801 = vadd.f32 0.0, %v800
      %v802 = vpop.f32.mrb[0].mxu0
      %v803 = vadd.f32 0.0, %v802
      %v804 = vpop.f32.mrb[0].mxu0
      %v805 = vadd.f32 0.0, %v804
      %v806 = vpop.f32.mrb[0].mxu0
      %v807 = vadd.f32 0.0, %v806
      %808 = vmatprep.mubr.bf16.mxu0 0
      %809 = vmatmul.mubr.bf16.gmra.mrb[0].mxu0 %v431
      %v810 = vpop.f32.mrb[0].mxu0
      %v811 = vadd.f32 0.0, %v810
      %v812 = vpop.f32.mrb[0].mxu0
      %v813 = vadd.f32 0.0, %v812
      %v814 = vpop.f32.mrb[0].mxu0
      %v815 = vadd.f32 0.0, %v814
      %v816 = vpop.f32.mrb[0].mxu0
      %v817 = vadd.f32 0.0, %v816
      %818 = vdwg.mxu0
      %819 = vmatprep.subr.bf16.mxu0 %v357
      %820 = vmatpush1.bf16.msra.mxu0 %v356
      %821 = vmatprep.subr.bf16.mxu0 %v365
      %822 = vmatpush1.bf16.msra.mxu0 %v364
      %823 = vmatprep.subr.bf16.mxu0 0
      %824 = vmatpush1.bf16.msra.mxu0 0
      %825 = vmatprep.subr.bf16.mxu0 0
      %826 = vmatpush1.bf16.msra.mxu0 0
      %827 = vmatprep.subr.bf16.mxu0 0
      %828 = vmatpush1.bf16.msra.mxu0 0
      %829 = vmatprep.subr.bf16.mxu0 0
      %830 = vmatpush1.bf16.msra.mxu0 0
      %831 = vmatprep.subr.bf16.mxu0 0
      %832 = vmatpush1.bf16.msra.mxu0 0
      %833 = vmatprep.subr.bf16.mxu0 0
      %834 = vmatpush1.bf16.msra.mxu0 0
      %835 = vmatprep.subr.bf16.mxu0 0
      %836 = vmatpush1.bf16.msra.mxu0 0
      %837 = vmatprep.subr.bf16.mxu0 0
      %838 = vmatpush1.bf16.msra.mxu0 0
      %839 = vmatprep.subr.bf16.mxu0 0
      %840 = vmatpush1.bf16.msra.mxu0 0
      %841 = vmatprep.subr.bf16.mxu0 0
      %842 = vmatpush1.bf16.msra.mxu0 0
      %843 = vmatprep.subr.bf16.mxu0 0
      %844 = vmatpush1.bf16.msra.mxu0 0
      %845 = vmatprep.subr.bf16.mxu0 0
      %846 = vmatpush1.bf16.msra.mxu0 0
      %847 = vmatprep.subr.bf16.mxu0 0
      %848 = vmatpush1.bf16.msra.mxu0 0
      %849 = vmatprep.subr.bf16.mxu0 0
      %850 = vmatpush1.bf16.msra.mxu0 0
      %851 = vmatprep.mubr.bf16.mxu0 0
      %852 = vmatmul.mubr.bf16.gmra.mrb[0].mxu0 %v386
      %v853 = vpop.f32.mrb[0].mxu0
      %v854 = vadd.f32 0.0, %v853
      %v855 = vpop.f32.mrb[0].mxu0
      %v856 = vadd.f32 0.0, %v855
      %v857 = vpop.f32.mrb[0].mxu0
      %v858 = vadd.f32 0.0, %v857
      %v859 = vpop.f32.mrb[0].mxu0
      %v860 = vadd.f32 0.0, %v859
      %861 = vmatprep.mubr.bf16.mxu0 0
      %862 = vmatmul.mubr.bf16.gmra.mrb[0].mxu0 %v389
      %v863 = vpop.f32.mrb[0].mxu0
      %v864 = vadd.f32 0.0, %v863
      %v865 = vpop.f32.mrb[0].mxu0
      %v866 = vadd.f32 0.0, %v865
      %v867 = vpop.f32.mrb[0].mxu0
      %v868 = vadd.f32 0.0, %v867
      %v869 = vpop.f32.mrb[0].mxu0
      %v870 = vadd.f32 0.0, %v869
      %871 = vmatprep.mubr.bf16.mxu0 0
      %872 = vmatmul.mubr.bf16.gmra.mrb[0].mxu0 %v392
      %v873 = vpop.f32.mrb[0].mxu0
      %v874 = vadd.f32 0.0, %v873
      %v875 = vpop.f32.mrb[0].mxu0
      %v876 = vadd.f32 0.0, %v875
      %v877 = vpop.f32.mrb[0].mxu0
      %v878 = vadd.f32 0.0, %v877
      %v879 = vpop.f32.mrb[0].mxu0
      %v880 = vadd.f32 0.0, %v879
      %881 = vmatprep.mubr.bf16.mxu0 0
      %882 = vmatmul.mubr.bf16.gmra.mrb[0].mxu0 %v395
      %v883 = vpop.f32.mrb[0].mxu0
      %v884 = vadd.f32 0.0, %v883
      %v885 = vpop.f32.mrb[0].mxu0
      %v886 = vadd.f32 0.0, %v885
      %v887 = vpop.f32.mrb[0].mxu0
      %v888 = vadd.f32 0.0, %v887
      %v889 = vpop.f32.mrb[0].mxu0
      %v890 = vadd.f32 0.0, %v889
      %891 = vmatprep.mubr.bf16.mxu0 0
      %892 = vmatmul.mubr.bf16.gmra.mrb[0].mxu0 %v398
      %v893 = vpop.f32.mrb[0].mxu0
      %v894 = vadd.f32 0.0, %v893
      %v895 = vpop.f32.mrb[0].mxu0
      %v896 = vadd.f32 0.0, %v895
      %v897 = vpop.f32.mrb[0].mxu0
      %v898 = vadd.f32 0.0, %v897
      %v899 = vpop.f32.mrb[0].mxu0
      %v900 = vadd.f32 0.0, %v899
      %901 = vmatprep.mubr.bf16.mxu0 0
      %902 = vmatmul.mubr.bf16.gmra.mrb[0].mxu0 %v401
      %v903 = vpop.f32.mrb[0].mxu0
      %v904 = vadd.f32 0.0, %v903
      %v905 = vpop.f32.mrb[0].mxu0
      %v906 = vadd.f32 0.0, %v905
      %v907 = vpop.f32.mrb[0].mxu0
      %v908 = vadd.f32 0.0, %v907
      %v909 = vpop.f32.mrb[0].mxu0
      %v910 = vadd.f32 0.0, %v909
      %911 = vmatprep.mubr.bf16.mxu0 0
      %912 = vmatmul.mubr.bf16.gmra.mrb[0].mxu0 %v404
      %v913 = vpop.f32.mrb[0].mxu0
      %v914 = vadd.f32 0.0, %v913
      %v915 = vpop.f32.mrb[0].mxu0
      %v916 = vadd.f32 0.0, %v915
      %v917 = vpop.f32.mrb[0].mxu0
      %v918 = vadd.f32 0.0, %v917
      %v919 = vpop.f32.mrb[0].mxu0
      %v920 = vadd.f32 0.0, %v919
      %921 = vmatprep.mubr.bf16.mxu0 0
      %922 = vmatmul.mubr.bf16.gmra.mrb[0].mxu0 %v407
      %v923 = vpop.f32.mrb[0].mxu0
      %v924 = vadd.f32 0.0, %v923
      %v925 = vpop.f32.mrb[0].mxu0
      %v926 = vadd.f32 0.0, %v925
      %v927 = vpop.f32.mrb[0].mxu0
      %v928 = vadd.f32 0.0, %v927
      %v929 = vpop.f32.mrb[0].mxu0
      %v930 = vadd.f32 0.0, %v929
      %931 = vmatprep.mubr.bf16.mxu0 0
      %932 = vmatmul.mubr.bf16.gmra.mrb[0].mxu0 %v410
      %v933 = vpop.f32.mrb[0].mxu0
      %v934 = vadd.f32 0.0, %v933
      %v935 = vpop.f32.mrb[0].mxu0
      %v936 = vadd.f32 0.0, %v935
      %v937 = vpop.f32.mrb[0].mxu0
      %v938 = vadd.f32 0.0, %v937
      %v939 = vpop.f32.mrb[0].mxu0
      %v940 = vadd.f32 0.0, %v939
      %941 = vmatprep.mubr.bf16.mxu0 0
      %942 = vmatmul.mubr.bf16.gmra.mrb[0].mxu0 %v413
      %v943 = vpop.f32.mrb[0].mxu0
      %v944 = vadd.f32 0.0, %v943
      %v945 = vpop.f32.mrb[0].mxu0
      %v946 = vadd.f32 0.0, %v945
      %v947 = vpop.f32.mrb[0].mxu0
      %v948 = vadd.f32 0.0, %v947
      %v949 = vpop.f32.mrb[0].mxu0
      %v950 = vadd.f32 0.0, %v949
      %951 = vmatprep.mubr.bf16.mxu0 0
      %952 = vmatmul.mubr.bf16.gmra.mrb[0].mxu0 %v416
      %v953 = vpop.f32.mrb[0].mxu0
      %v954 = vadd.f32 0.0, %v953
      %v955 = vpop.f32.mrb[0].mxu0
      %v956 = vadd.f32 0.0, %v955
      %v957 = vpop.f32.mrb[0].mxu0
      %v958 = vadd.f32 0.0, %v957
      %v959 = vpop.f32.mrb[0].mxu0
      %v960 = vadd.f32 0.0, %v959
      %961 = vmatprep.mubr.bf16.mxu0 0
      %962 = vmatmul.mubr.bf16.gmra.mrb[0].mxu0 %v419
      %v963 = vpop.f32.mrb[0].mxu0
      %v964 = vadd.f32 0.0, %v963
      %v965 = vpop.f32.mrb[0].mxu0
      %v966 = vadd.f32 0.0, %v965
      %v967 = vpop.f32.mrb[0].mxu0
      %v968 = vadd.f32 0.0, %v967
      %v969 = vpop.f32.mrb[0].mxu0
      %v970 = vadd.f32 0.0, %v969
      %971 = vmatprep.mubr.bf16.mxu0 0
      %972 = vmatmul.mubr.bf16.gmra.mrb[0].mxu0 %v422
      %v973 = vpop.f32.mrb[0].mxu0
      %v974 = vadd.f32 0.0, %v973
      %v975 = vpop.f32.mrb[0].mxu0
      %v976 = vadd.f32 0.0, %v975
      %v977 = vpop.f32.mrb[0].mxu0
      %v978 = vadd.f32 0.0, %v977
      %v979 = vpop.f32.mrb[0].mxu0
      %v980 = vadd.f32 0.0, %v979
      %981 = vmatprep.mubr.bf16.mxu0 0
      %982 = vmatmul.mubr.bf16.gmra.mrb[0].mxu0 %v425
      %v983 = vpop.f32.mrb[0].mxu0
      %v984 = vadd.f32 0.0, %v983
      %v985 = vpop.f32.mrb[0].mxu0
      %v986 = vadd.f32 0.0, %v985
      %v987 = vpop.f32.mrb[0].mxu0
      %v988 = vadd.f32 0.0, %v987
      %v989 = vpop.f32.mrb[0].mxu0
      %v990 = vadd.f32 0.0, %v989
      %991 = vmatprep.mubr.bf16.mxu0 0
      %992 = vmatmul.mubr.bf16.gmra.mrb[0].mxu0 %v428
      %v993 = vpop.f32.mrb[0].mxu0
      %v994 = vadd.f32 0.0, %v993
      %v995 = vpop.f32.mrb[0].mxu0
      %v996 = vadd.f32 0.0, %v995
      %v997 = vpop.f32.mrb[0].mxu0
      %v998 = vadd.f32 0.0, %v997
      %v999 = vpop.f32.mrb[0].mxu0
      %v1000 = vadd.f32 0.0, %v999
      %1001 = vmatprep.mubr.bf16.mxu0 0
      %1002 = vmatmul.mubr.bf16.gmra.mrb[0].mxu0 %v431
      %v1003 = vpop.f32.mrb[0].mxu0
      %v1004 = vadd.f32 0.0, %v1003
      %v1005 = vpop.f32.mrb[0].mxu0
      %v1006 = vadd.f32 0.0, %v1005
      %v1007 = vpop.f32.mrb[0].mxu0
      %v1008 = vadd.f32 0.0, %v1007
      %v1009 = vpop.f32.mrb[0].mxu0
      %v1010 = vadd.f32 0.0, %v1009
      %1011 = vdwg.mxu0
      %1012 = vmatprep.subr.bf16.mxu0 %v359
      %1013 = vmatpush1.bf16.msra.mxu0 %v358
      %1014 = vmatprep.subr.bf16.mxu0 %v367
      %1015 = vmatpush1.bf16.msra.mxu0 %v366
      %1016 = vmatprep.subr.bf16.mxu0 0
      %1017 = vmatpush1.bf16.msra.mxu0 0
      %1018 = vmatprep.subr.bf16.mxu0 0
      %1019 = vmatpush1.bf16.msra.mxu0 0
      %1020 = vmatprep.subr.bf16.mxu0 0
      %1021 = vmatpush1.bf16.msra.mxu0 0
      %1022 = vmatprep.subr.bf16.mxu0 0
      %1023 = vmatpush1.bf16.msra.mxu0 0
      %1024 = vmatprep.subr.bf16.mxu0 0
      %1025 = vmatpush1.bf16.msra.mxu0 0
      %1026 = vmatprep.subr.bf16.mxu0 0
      %1027 = vmatpush1.bf16.msra.mxu0 0
      %1028 = vmatprep.subr.bf16.mxu0 0
      %1029 = vmatpush1.bf16.msra.mxu0 0
      %1030 = vmatprep.subr.bf16.mxu0 0
      %1031 = vmatpush1.bf16.msra.mxu0 0
      %1032 = vmatprep.subr.bf16.mxu0 0
      %1033 = vmatpush1.bf16.msra.mxu0 0
      %1034 = vmatprep.subr.bf16.mxu0 0
      %1035 = vmatpush1.bf16.msra.mxu0 0
      %1036 = vmatprep.subr.bf16.mxu0 0
      %1037 = vmatpush1.bf16.msra.mxu0 0
      %1038 = vmatprep.subr.bf16.mxu0 0
      %1039 = vmatpush1.bf16.msra.mxu0 0
      %1040 = vmatprep.subr.bf16.mxu0 0
      %1041 = vmatpush1.bf16.msra.mxu0 0
      %1042 = vmatprep.subr.bf16.mxu0 0
      %1043 = vmatpush1.bf16.msra.mxu0 0
      %1044 = vmatprep.mubr.bf16.mxu0 0
      %1045 = vmatmul.mubr.bf16.gmra.mrb[0].mxu0 %v386
      %v1046 = vpop.f32.mrb[0].mxu0
      %v1047 = vadd.f32 0.0, %v1046
      %v1048 = vpop.f32.mrb[0].mxu0
      %v1049 = vadd.f32 0.0, %v1048
      %v1050 = vpop.f32.mrb[0].mxu0
      %v1051 = vadd.f32 0.0, %v1050
      %v1052 = vpop.f32.mrb[0].mxu0
      %v1053 = vadd.f32 0.0, %v1052
      %1054 = vmatprep.mubr.bf16.mxu0 0
      %1055 = vmatmul.mubr.bf16.gmra.mrb[0].mxu0 %v389
      %v1056 = vpop.f32.mrb[0].mxu0
      %v1057 = vadd.f32 0.0, %v1056
      %v1058 = vpop.f32.mrb[0].mxu0
      %v1059 = vadd.f32 0.0, %v1058
      %v1060 = vpop.f32.mrb[0].mxu0
      %v1061 = vadd.f32 0.0, %v1060
      %v1062 = vpop.f32.mrb[0].mxu0
      %v1063 = vadd.f32 0.0, %v1062
      %1064 = vmatprep.mubr.bf16.mxu0 0
      %1065 = vmatmul.mubr.bf16.gmra.mrb[0].mxu0 %v392
      %v1066 = vpop.f32.mrb[0].mxu0
      %v1067 = vadd.f32 0.0, %v1066
      %v1068 = vpop.f32.mrb[0].mxu0
      %v1069 = vadd.f32 0.0, %v1068
      %v1070 = vpop.f32.mrb[0].mxu0
      %v1071 = vadd.f32 0.0, %v1070
      %v1072 = vpop.f32.mrb[0].mxu0
      %v1073 = vadd.f32 0.0, %v1072
      %1074 = vmatprep.mubr.bf16.mxu0 0
      %1075 = vmatmul.mubr.bf16.gmra.mrb[0].mxu0 %v395
      %v1076 = vpop.f32.mrb[0].mxu0
      %v1077 = vadd.f32 0.0, %v1076
      %v1078 = vpop.f32.mrb[0].mxu0
      %v1079 = vadd.f32 0.0, %v1078
      %v1080 = vpop.f32.mrb[0].mxu0
      %v1081 = vadd.f32 0.0, %v1080
      %v1082 = vpop.f32.mrb[0].mxu0
      %v1083 = vadd.f32 0.0, %v1082
      %1084 = vmatprep.mubr.bf16.mxu0 0
      %1085 = vmatmul.mubr.bf16.gmra.mrb[0].mxu0 %v398
      %v1086 = vpop.f32.mrb[0].mxu0
      %v1087 = vadd.f32 0.0, %v1086
      %v1088 = vpop.f32.mrb[0].mxu0
      %v1089 = vadd.f32 0.0, %v1088
      %v1090 = vpop.f32.mrb[0].mxu0
      %v1091 = vadd.f32 0.0, %v1090
      %v1092 = vpop.f32.mrb[0].mxu0
      %v1093 = vadd.f32 0.0, %v1092
      %1094 = vmatprep.mubr.bf16.mxu0 0
      %1095 = vmatmul.mubr.bf16.gmra.mrb[0].mxu0 %v401
      %v1096 = vpop.f32.mrb[0].mxu0
      %v1097 = vadd.f32 0.0, %v1096
      %v1098 = vpop.f32.mrb[0].mxu0
      %v1099 = vadd.f32 0.0, %v1098
      %v1100 = vpop.f32.mrb[0].mxu0
      %v1101 = vadd.f32 0.0, %v1100
      %v1102 = vpop.f32.mrb[0].mxu0
      %v1103 = vadd.f32 0.0, %v1102
      %1104 = vmatprep.mubr.bf16.mxu0 0
      %1105 = vmatmul.mubr.bf16.gmra.mrb[0].mxu0 %v404
      %v1106 = vpop.f32.mrb[0].mxu0
      %v1107 = vadd.f32 0.0, %v1106
      %v1108 = vpop.f32.mrb[0].mxu0
      %v1109 = vadd.f32 0.0, %v1108
      %v1110 = vpop.f32.mrb[0].mxu0
      %v1111 = vadd.f32 0.0, %v1110
      %v1112 = vpop.f32.mrb[0].mxu0
      %v1113 = vadd.f32 0.0, %v1112
      %1114 = vmatprep.mubr.bf16.mxu0 0
      %1115 = vmatmul.mubr.bf16.gmra.mrb[0].mxu0 %v407
      %v1116 = vpop.f32.mrb[0].mxu0
      %v1117 = vadd.f32 0.0, %v1116
      %v1118 = vpop.f32.mrb[0].mxu0
      %v1119 = vadd.f32 0.0, %v1118
      %v1120 = vpop.f32.mrb[0].mxu0
      %v1121 = vadd.f32 0.0, %v1120
      %v1122 = vpop.f32.mrb[0].mxu0
      %v1123 = vadd.f32 0.0, %v1122
      %1124 = vmatprep.mubr.bf16.mxu0 0
      %1125 = vmatmul.mubr.bf16.gmra.mrb[0].mxu0 %v410
      %v1126 = vpop.f32.mrb[0].mxu0
      %v1127 = vadd.f32 0.0, %v1126
      %v1128 = vpop.f32.mrb[0].mxu0
      %v1129 = vadd.f32 0.0, %v1128
      %v1130 = vpop.f32.mrb[0].mxu0
      %v1131 = vadd.f32 0.0, %v1130
      %v1132 = vpop.f32.mrb[0].mxu0
      %v1133 = vadd.f32 0.0, %v1132
      %1134 = vmatprep.mubr.bf16.mxu0 0
      %1135 = vmatmul.mubr.bf16.gmra.mrb[0].mxu0 %v413
      %v1136 = vpop.f32.mrb[0].mxu0
      %v1137 = vadd.f32 0.0, %v1136
      %v1138 = vpop.f32.mrb[0].mxu0
      %v1139 = vadd.f32 0.0, %v1138
      %v1140 = vpop.f32.mrb[0].mxu0
      %v1141 = vadd.f32 0.0, %v1140
      %v1142 = vpop.f32.mrb[0].mxu0
      %v1143 = vadd.f32 0.0, %v1142
      %1144 = vmatprep.mubr.bf16.mxu0 0
      %1145 = vmatmul.mubr.bf16.gmra.mrb[0].mxu0 %v416
      %v1146 = vpop.f32.mrb[0].mxu0
      %v1147 = vadd.f32 0.0, %v1146
      %v1148 = vpop.f32.mrb[0].mxu0
      %v1149 = vadd.f32 0.0, %v1148
      %v1150 = vpop.f32.mrb[0].mxu0
      %v1151 = vadd.f32 0.0, %v1150
      %v1152 = vpop.f32.mrb[0].mxu0
      %v1153 = vadd.f32 0.0, %v1152
      %1154 = vmatprep.mubr.bf16.mxu0 0
      %1155 = vmatmul.mubr.bf16.gmra.mrb[0].mxu0 %v419
      %v1156 = vpop.f32.mrb[0].mxu0
      %v1157 = vadd.f32 0.0, %v1156
      %v1158 = vpop.f32.mrb[0].mxu0
      %v1159 = vadd.f32 0.0, %v1158
      %v1160 = vpop.f32.mrb[0].mxu0
      %v1161 = vadd.f32 0.0, %v1160
      %v1162 = vpop.f32.mrb[0].mxu0
      %v1163 = vadd.f32 0.0, %v1162
      %1164 = vmatprep.mubr.bf16.mxu0 0
      %1165 = vmatmul.mubr.bf16.gmra.mrb[0].mxu0 %v422
      %v1166 = vpop.f32.mrb[0].mxu0
      %v1167 = vadd.f32 0.0, %v1166
      %v1168 = vpop.f32.mrb[0].mxu0
      %v1169 = vadd.f32 0.0, %v1168
      %v1170 = vpop.f32.mrb[0].mxu0
      %v1171 = vadd.f32 0.0, %v1170
      %v1172 = vpop.f32.mrb[0].mxu0
      %v1173 = vadd.f32 0.0, %v1172
      %1174 = vmatprep.mubr.bf16.mxu0 0
      %1175 = vmatmul.mubr.bf16.gmra.mrb[0].mxu0 %v425
      %v1176 = vpop.f32.mrb[0].mxu0
      %v1177 = vadd.f32 0.0, %v1176
      %v1178 = vpop.f32.mrb[0].mxu0
      %v1179 = vadd.f32 0.0, %v1178
      %v1180 = vpop.f32.mrb[0].mxu0
      %v1181 = vadd.f32 0.0, %v1180
      %v1182 = vpop.f32.mrb[0].mxu0
      %v1183 = vadd.f32 0.0, %v1182
      %1184 = vmatprep.mubr.bf16.mxu0 0
      %1185 = vmatmul.mubr.bf16.gmra.mrb[0].mxu0 %v428
      %v1186 = vpop.f32.mrb[0].mxu0
      %v1187 = vadd.f32 0.0, %v1186
      %v1188 = vpop.f32.mrb[0].mxu0
      %v1189 = vadd.f32 0.0, %v1188
      %v1190 = vpop.f32.mrb[0].mxu0
      %v1191 = vadd.f32 0.0, %v1190
      %v1192 = vpop.f32.mrb[0].mxu0
      %v1193 = vadd.f32 0.0, %v1192
      %1194 = vmatprep.mubr.bf16.mxu0 0
      %1195 = vmatmul.mubr.bf16.gmra.mrb[0].mxu0 %v431
      %v1196 = vpop.f32.mrb[0].mxu0
      %v1197 = vadd.f32 0.0, %v1196
      %v1198 = vpop.f32.mrb[0].mxu0
      %v1199 = vadd.f32 0.0, %v1198
      %v1200 = vpop.f32.mrb[0].mxu0
      %v1201 = vadd.f32 0.0, %v1200
      %v1202 = vpop.f32.mrb[0].mxu0
      %v1203 = vadd.f32 0.0, %v1202
      %1204 = vdwg.mxu0
      %v1205 = vmax.f32 %v468, 0.0
      %v1206 = vmax.f32 %v470, 0.0
      %v1207 = vmax.f32 %v661, 0.0
      %v1208 = vmax.f32 %v663, 0.0
      %v1209 = vmax.f32 %v854, 0.0
      %v1210 = vmax.f32 %v856, 0.0
      %v1211 = vmax.f32 %v1047, 0.0
      %v1212 = vmax.f32 %v1049, 0.0
      %v1213 = vmax.f32 %v472, 0.0
      %v1214 = vmax.f32 %v474, 0.0
      %v1215 = vmax.f32 %v665, 0.0
      %v1216 = vmax.f32 %v667, 0.0
      %v1217 = vmax.f32 %v858, 0.0
      %v1218 = vmax.f32 %v860, 0.0
      %v1219 = vmax.f32 %v1051, 0.0
      %v1220 = vmax.f32 %v1053, 0.0
      %v1221 = vmax.f32 %v478, 0.0
      %v1222 = vmax.f32 %v480, 0.0
      %v1223 = vmax.f32 %v671, 0.0
      %v1224 = vmax.f32 %v673, 0.0
      %v1225 = vmax.f32 %v864, 0.0
      %v1226 = vmax.f32 %v866, 0.0
      %v1227 = vmax.f32 %v1057, 0.0
      %v1228 = vmax.f32 %v1059, 0.0
      %v1229 = vmax.f32 %v482, 0.0
      %v1230 = vmax.f32 %v484, 0.0
      %v1231 = vmax.f32 %v675, 0.0
      %v1232 = vmax.f32 %v677, 0.0
      %v1233 = vmax.f32 %v868, 0.0
      %v1234 = vmax.f32 %v870, 0.0
      %v1235 = vmax.f32 %v1061, 0.0
      %v1236 = vmax.f32 %v1063, 0.0
      %v1237 = vmax.f32 %v488, 0.0
      %v1238 = vmax.f32 %v490, 0.0
      %v1239 = vmax.f32 %v681, 0.0
      %v1240 = vmax.f32 %v683, 0.0
      %v1241 = vmax.f32 %v874, 0.0
      %v1242 = vmax.f32 %v876, 0.0
      %v1243 = vmax.f32 %v1067, 0.0
      %v1244 = vmax.f32 %v1069, 0.0
      %v1245 = vmax.f32 %v492, 0.0
      %v1246 = vmax.f32 %v494, 0.0
      %v1247 = vmax.f32 %v685, 0.0
      %v1248 = vmax.f32 %v687, 0.0
      %v1249 = vmax.f32 %v878, 0.0
      %v1250 = vmax.f32 %v880, 0.0
      %v1251 = vmax.f32 %v1071, 0.0
      %v1252 = vmax.f32 %v1073, 0.0
      %v1253 = vmax.f32 %v498, 0.0
      %v1254 = vmax.f32 %v500, 0.0
      %v1255 = vmax.f32 %v691, 0.0
      %v1256 = vmax.f32 %v693, 0.0
      %v1257 = vmax.f32 %v884, 0.0
      %v1258 = vmax.f32 %v886, 0.0
      %v1259 = vmax.f32 %v1077, 0.0
      %v1260 = vmax.f32 %v1079, 0.0
      %v1261 = vmax.f32 %v502, 0.0
      %v1262 = vmax.f32 %v504, 0.0
      %v1263 = vmax.f32 %v695, 0.0
      %v1264 = vmax.f32 %v697, 0.0
      %v1265 = vmax.f32 %v888, 0.0
      %v1266 = vmax.f32 %v890, 0.0
      %v1267 = vmax.f32 %v1081, 0.0
      %v1268 = vmax.f32 %v1083, 0.0
      %v1269 = vmax.f32 %v508, 0.0
      %v1270 = vmax.f32 %v510, 0.0
      %v1271 = vmax.f32 %v701, 0.0
      %v1272 = vmax.f32 %v703, 0.0
      %v1273 = vmax.f32 %v894, 0.0
      %v1274 = vmax.f32 %v896, 0.0
      %v1275 = vmax.f32 %v1087, 0.0
      %v1276 = vmax.f32 %v1089, 0.0
      %v1277 = vmax.f32 %v512, 0.0
      %v1278 = vmax.f32 %v514, 0.0
      %v1279 = vmax.f32 %v705, 0.0
      %v1280 = vmax.f32 %v707, 0.0
      %v1281 = vmax.f32 %v898, 0.0
      %v1282 = vmax.f32 %v900, 0.0
      %v1283 = vmax.f32 %v1091, 0.0
      %v1284 = vmax.f32 %v1093, 0.0
      %v1285 = vmax.f32 %v518, 0.0
      %v1286 = vmax.f32 %v520, 0.0
      %v1287 = vmax.f32 %v711, 0.0
      %v1288 = vmax.f32 %v713, 0.0
      %v1289 = vmax.f32 %v904, 0.0
      %v1290 = vmax.f32 %v906, 0.0
      %v1291 = vmax.f32 %v1097, 0.0
      %v1292 = vmax.f32 %v1099, 0.0
      %v1293 = vmax.f32 %v522, 0.0
      %v1294 = vmax.f32 %v524, 0.0
      %v1295 = vmax.f32 %v715, 0.0
      %v1296 = vmax.f32 %v717, 0.0
      %v1297 = vmax.f32 %v908, 0.0
      %v1298 = vmax.f32 %v910, 0.0
      %v1299 = vmax.f32 %v1101, 0.0
      %v1300 = vmax.f32 %v1103, 0.0
      %v1301 = vmax.f32 %v528, 0.0
      %v1302 = vmax.f32 %v530, 0.0
      %v1303 = vmax.f32 %v721, 0.0
      %v1304 = vmax.f32 %v723, 0.0
      %v1305 = vmax.f32 %v914, 0.0
      %v1306 = vmax.f32 %v916, 0.0
      %v1307 = vmax.f32 %v1107, 0.0
      %v1308 = vmax.f32 %v1109, 0.0
      %v1309 = vmax.f32 %v532, 0.0
      %v1310 = vmax.f32 %v534, 0.0
      %v1311 = vmax.f32 %v725, 0.0
      %v1312 = vmax.f32 %v727, 0.0
      %v1313 = vmax.f32 %v918, 0.0
      %v1314 = vmax.f32 %v920, 0.0
      %v1315 = vmax.f32 %v1111, 0.0
      %v1316 = vmax.f32 %v1113, 0.0
      %v1317 = vmax.f32 %v538, 0.0
      %v1318 = vmax.f32 %v540, 0.0
      %v1319 = vmax.f32 %v731, 0.0
      %v1320 = vmax.f32 %v733, 0.0
      %v1321 = vmax.f32 %v924, 0.0
      %v1322 = vmax.f32 %v926, 0.0
      %v1323 = vmax.f32 %v1117, 0.0
      %v1324 = vmax.f32 %v1119, 0.0
      %v1325 = vmax.f32 %v542, 0.0
      %v1326 = vmax.f32 %v544, 0.0
      %v1327 = vmax.f32 %v735, 0.0
      %v1328 = vmax.f32 %v737, 0.0
      %v1329 = vmax.f32 %v928, 0.0
      %v1330 = vmax.f32 %v930, 0.0
      %v1331 = vmax.f32 %v1121, 0.0
      %v1332 = vmax.f32 %v1123, 0.0
      %v1333 = vmax.f32 %v548, 0.0
      %v1334 = vmax.f32 %v550, 0.0
      %v1335 = vmax.f32 %v741, 0.0
      %v1336 = vmax.f32 %v743, 0.0
      %v1337 = vmax.f32 %v934, 0.0
      %v1338 = vmax.f32 %v936, 0.0
      %v1339 = vmax.f32 %v1127, 0.0
      %v1340 = vmax.f32 %v1129, 0.0
      %v1341 = vmax.f32 %v552, 0.0
      %v1342 = vmax.f32 %v554, 0.0
      %v1343 = vmax.f32 %v745, 0.0
      %v1344 = vmax.f32 %v747, 0.0
      %v1345 = vmax.f32 %v938, 0.0
      %v1346 = vmax.f32 %v940, 0.0
      %v1347 = vmax.f32 %v1131, 0.0
      %v1348 = vmax.f32 %v1133, 0.0
      %v1349 = vmax.f32 %v558, 0.0
      %v1350 = vmax.f32 %v560, 0.0
      %v1351 = vmax.f32 %v751, 0.0
      %v1352 = vmax.f32 %v753, 0.0
      %v1353 = vmax.f32 %v944, 0.0
      %v1354 = vmax.f32 %v946, 0.0
      %v1355 = vmax.f32 %v1137, 0.0
      %v1356 = vmax.f32 %v1139, 0.0
      %v1357 = vmax.f32 %v562, 0.0
      %v1358 = vmax.f32 %v564, 0.0
      %v1359 = vmax.f32 %v755, 0.0
      %v1360 = vmax.f32 %v757, 0.0
      %v1361 = vmax.f32 %v948, 0.0
      %v1362 = vmax.f32 %v950, 0.0
      %v1363 = vmax.f32 %v1141, 0.0
      %v1364 = vmax.f32 %v1143, 0.0
      %v1365 = vmax.f32 %v568, 0.0
      %v1366 = vmax.f32 %v570, 0.0
      %v1367 = vmax.f32 %v761, 0.0
      %v1368 = vmax.f32 %v763, 0.0
      %v1369 = vmax.f32 %v954, 0.0
      %v1370 = vmax.f32 %v956, 0.0
      %v1371 = vmax.f32 %v1147, 0.0
      %v1372 = vmax.f32 %v1149, 0.0
      %v1373 = vmax.f32 %v572, 0.0
      %v1374 = vmax.f32 %v574, 0.0
      %v1375 = vmax.f32 %v765, 0.0
      %v1376 = vmax.f32 %v767, 0.0
      %v1377 = vmax.f32 %v958, 0.0
      %v1378 = vmax.f32 %v960, 0.0
      %v1379 = vmax.f32 %v1151, 0.0
      %v1380 = vmax.f32 %v1153, 0.0
      %v1381 = vmax.f32 %v578, 0.0
      %v1382 = vmax.f32 %v580, 0.0
      %v1383 = vmax.f32 %v771, 0.0
      %v1384 = vmax.f32 %v773, 0.0
      %v1385 = vmax.f32 %v964, 0.0
      %v1386 = vmax.f32 %v966, 0.0
      %v1387 = vmax.f32 %v1157, 0.0
      %v1388 = vmax.f32 %v1159, 0.0
      %v1389 = vmax.f32 %v582, 0.0
      %v1390 = vmax.f32 %v584, 0.0
      %v1391 = vmax.f32 %v775, 0.0
      %v1392 = vmax.f32 %v777, 0.0
      %v1393 = vmax.f32 %v968, 0.0
      %v1394 = vmax.f32 %v970, 0.0
      %v1395 = vmax.f32 %v1161, 0.0
      %v1396 = vmax.f32 %v1163, 0.0
      %v1397 = vmax.f32 %v588, 0.0
      %v1398 = vmax.f32 %v590, 0.0
      %v1399 = vmax.f32 %v781, 0.0
      %v1400 = vmax.f32 %v783, 0.0
      %v1401 = vmax.f32 %v974, 0.0
      %v1402 = vmax.f32 %v976, 0.0
      %v1403 = vmax.f32 %v1167, 0.0
      %v1404 = vmax.f32 %v1169, 0.0
      %v1405 = vmax.f32 %v592, 0.0
      %v1406 = vmax.f32 %v594, 0.0
      %v1407 = vmax.f32 %v785, 0.0
      %v1408 = vmax.f32 %v787, 0.0
      %v1409 = vmax.f32 %v978, 0.0
      %v1410 = vmax.f32 %v980, 0.0
      %v1411 = vmax.f32 %v1171, 0.0
      %v1412 = vmax.f32 %v1173, 0.0
      %v1413 = vmax.f32 %v598, 0.0
      %v1414 = vmax.f32 %v600, 0.0
      %v1415 = vmax.f32 %v791, 0.0
      %v1416 = vmax.f32 %v793, 0.0
      %v1417 = vmax.f32 %v984, 0.0
      %v1418 = vmax.f32 %v986, 0.0
      %v1419 = vmax.f32 %v1177, 0.0
      %v1420 = vmax.f32 %v1179, 0.0
      %v1421 = vmax.f32 %v602, 0.0
      %v1422 = vmax.f32 %v604, 0.0
      %v1423 = vmax.f32 %v795, 0.0
      %v1424 = vmax.f32 %v797, 0.0
      %v1425 = vmax.f32 %v988, 0.0
      %v1426 = vmax.f32 %v990, 0.0
      %v1427 = vmax.f32 %v1181, 0.0
      %v1428 = vmax.f32 %v1183, 0.0
      %v1429 = vmax.f32 %v608, 0.0
      %v1430 = vmax.f32 %v610, 0.0
      %v1431 = vmax.f32 %v801, 0.0
      %v1432 = vmax.f32 %v803, 0.0
      %v1433 = vmax.f32 %v994, 0.0
      %v1434 = vmax.f32 %v996, 0.0
      %v1435 = vmax.f32 %v1187, 0.0
      %v1436 = vmax.f32 %v1189, 0.0
      %v1437 = vmax.f32 %v612, 0.0
      %v1438 = vmax.f32 %v614, 0.0
      %v1439 = vmax.f32 %v805, 0.0
      %v1440 = vmax.f32 %v807, 0.0
      %v1441 = vmax.f32 %v998, 0.0
      %v1442 = vmax.f32 %v1000, 0.0
      %v1443 = vmax.f32 %v1191, 0.0
      %v1444 = vmax.f32 %v1193, 0.0
      %v1445 = vmax.f32 %v618, 0.0
      %v1446 = vmax.f32 %v620, 0.0
      %v1447 = vmax.f32 %v811, 0.0
      %v1448 = vmax.f32 %v813, 0.0
      %v1449 = vmax.f32 %v1004, 0.0
      %v1450 = vmax.f32 %v1006, 0.0
      %v1451 = vmax.f32 %v1197, 0.0
      %v1452 = vmax.f32 %v1199, 0.0
      %v1453 = vmax.f32 %v622, 0.0
      %v1454 = vmax.f32 %v624, 0.0
      %v1455 = vmax.f32 %v815, 0.0
      %v1456 = vmax.f32 %v817, 0.0
      %v1457 = vmax.f32 %v1008, 0.0
      %v1458 = vmax.f32 %v1010, 0.0
      %v1459 = vmax.f32 %v1201, 0.0
      %v1460 = vmax.f32 %v1203, 0.0
      %v1461 = vld [vmem:[%s169] sm:$0xff]
      %v1462 = vadd.f32 %v1205, %v1213
      %v1463 = vadd.f32 %v1462, %v1221
      %v1464 = vadd.f32 %v1463, %v1229
      %v1465 = vadd.f32 %v1464, %v1237
      %v1466 = vadd.f32 %v1465, %v1245
      %v1467 = vadd.f32 %v1466, %v1253
      %v1468 = vadd.f32 %v1467, %v1261
      %v1469 = vadd.f32 %v1468, %v1269
      %v1470 = vadd.f32 %v1469, %v1277
      %v1471 = vadd.f32 %v1470, %v1285
      %v1472 = vadd.f32 %v1471, %v1293
      %v1473 = vadd.f32 %v1472, %v1301
      %v1474 = vadd.f32 %v1473, %v1309
      %v1475 = vadd.f32 %v1474, %v1317
      %v1476 = vadd.f32 %v1475, %v1325
      %v1477 = vadd.f32 %v1476, %v1333
      %v1478 = vadd.f32 %v1477, %v1341
      %v1479 = vadd.f32 %v1478, %v1349
      %v1480 = vadd.f32 %v1479, %v1357
      %v1481 = vadd.f32 %v1480, %v1365
      %v1482 = vadd.f32 %v1481, %v1373
      %v1483 = vadd.f32 %v1482, %v1381
      %v1484 = vadd.f32 %v1483, %v1389
      %v1485 = vadd.f32 %v1484, %v1397
      %v1486 = vadd.f32 %v1485, %v1405
      %v1487 = vadd.f32 %v1486, %v1413
      %v1488 = vadd.f32 %v1487, %v1421
      %v1489 = vadd.f32 %v1488, %v1429
      %v1490 = vadd.f32 %v1489, %v1437
      %v1491 = vadd.f32 %v1490, %v1445
      %v1492 = vadd.f32 %v1491, %v1453
      %v1493 = vrot.slane %v1492, 4
      %v1494 = vadd.f32 %v1492, %v1493
      %v1495 = vrot.slane %v1494, 2
      %v1496 = vadd.f32 %v1494, %v1495
      %v1497 = vrot.slane %v1496, 1
      %v1498 = vadd.f32 %v1496, %v1497
      %v1499 = vadd.f32 %v1206, %v1214
      %v1500 = vadd.f32 %v1499, %v1222
      %v1501 = vadd.f32 %v1500, %v1230
      %v1502 = vadd.f32 %v1501, %v1238
      %v1503 = vadd.f32 %v1502, %v1246
      %v1504 = vadd.f32 %v1503, %v1254
      %v1505 = vadd.f32 %v1504, %v1262
      %v1506 = vadd.f32 %v1505, %v1270
      %v1507 = vadd.f32 %v1506, %v1278
      %v1508 = vadd.f32 %v1507, %v1286
      %v1509 = vadd.f32 %v1508, %v1294
      %v1510 = vadd.f32 %v1509, %v1302
      %v1511 = vadd.f32 %v1510, %v1310
      %v1512 = vadd.f32 %v1511, %v1318
      %v1513 = vadd.f32 %v1512, %v1326
      %v1514 = vadd.f32 %v1513, %v1334
      %v1515 = vadd.f32 %v1514, %v1342
      %v1516 = vadd.f32 %v1515, %v1350
      %v1517 = vadd.f32 %v1516, %v1358
      %v1518 = vadd.f32 %v1517, %v1366
      %v1519 = vadd.f32 %v1518, %v1374
      %v1520 = vadd.f32 %v1519, %v1382
      %v1521 = vadd.f32 %v1520, %v1390
      %v1522 = vadd.f32 %v1521, %v1398
      %v1523 = vadd.f32 %v1522, %v1406
      %v1524 = vadd.f32 %v1523, %v1414
      %v1525 = vadd.f32 %v1524, %v1422
      %v1526 = vadd.f32 %v1525, %v1430
      %v1527 = vadd.f32 %v1526, %v1438
      %v1528 = vadd.f32 %v1527, %v1446
      %v1529 = vadd.f32 %v1528, %v1454
      %v1530 = vrot.slane %v1529, 4
      %v1531 = vadd.f32 %v1529, %v1530
      %v1532 = vrot.slane %v1531, 2
      %v1533 = vadd.f32 %v1531, %v1532
      %v1534 = vrot.slane %v1533, 1
      %v1535 = vadd.f32 %v1533, %v1534
      %v1536 = vadd.f32 %v1207, %v1215
      %v1537 = vadd.f32 %v1536, %v1223
      %v1538 = vadd.f32 %v1537, %v1231
      %v1539 = vadd.f32 %v1538, %v1239
      %v1540 = vadd.f32 %v1539, %v1247
      %v1541 = vadd.f32 %v1540, %v1255
      %v1542 = vadd.f32 %v1541, %v1263
      %v1543 = vadd.f32 %v1542, %v1271
      %v1544 = vadd.f32 %v1543, %v1279
      %v1545 = vadd.f32 %v1544, %v1287
      %v1546 = vadd.f32 %v1545, %v1295
      %v1547 = vadd.f32 %v1546, %v1303
      %v1548 = vadd.f32 %v1547, %v1311
      %v1549 = vadd.f32 %v1548, %v1319
      %v1550 = vadd.f32 %v1549, %v1327
      %v1551 = vadd.f32 %v1550, %v1335
      %v1552 = vadd.f32 %v1551, %v1343
      %v1553 = vadd.f32 %v1552, %v1351
      %v1554 = vadd.f32 %v1553, %v1359
      %v1555 = vadd.f32 %v1554, %v1367
      %v1556 = vadd.f32 %v1555, %v1375
      %v1557 = vadd.f32 %v1556, %v1383
      %v1558 = vadd.f32 %v1557, %v1391
      %v1559 = vadd.f32 %v1558, %v1399
      %v1560 = vadd.f32 %v1559, %v1407
      %v1561 = vadd.f32 %v1560, %v1415
      %v1562 = vadd.f32 %v1561, %v1423
      %v1563 = vadd.f32 %v1562, %v1431
      %v1564 = vadd.f32 %v1563, %v1439
      %v1565 = vadd.f32 %v1564, %v1447
      %v1566 = vadd.f32 %v1565, %v1455
      %v1567 = vrot.slane %v1566, 4
      %v1568 = vadd.f32 %v1566, %v1567
      %v1569 = vrot.slane %v1568, 2
      %v1570 = vadd.f32 %v1568, %v1569
      %v1571 = vrot.slane %v1570, 1
      %v1572 = vadd.f32 %v1570, %v1571
      %v1573 = vadd.f32 %v1208, %v1216
      %v1574 = vadd.f32 %v1573, %v1224
      %v1575 = vadd.f32 %v1574, %v1232
      %v1576 = vadd.f32 %v1575, %v1240
      %v1577 = vadd.f32 %v1576, %v1248
      %v1578 = vadd.f32 %v1577, %v1256
      %v1579 = vadd.f32 %v1578, %v1264
      %v1580 = vadd.f32 %v1579, %v1272
      %v1581 = vadd.f32 %v1580, %v1280
      %v1582 = vadd.f32 %v1581, %v1288
      %v1583 = vadd.f32 %v1582, %v1296
      %v1584 = vadd.f32 %v1583, %v1304
      %v1585 = vadd.f32 %v1584, %v1312
      %v1586 = vadd.f32 %v1585, %v1320
      %v1587 = vadd.f32 %v1586, %v1328
      %v1588 = vadd.f32 %v1587, %v1336
      %v1589 = vadd.f32 %v1588, %v1344
      %v1590 = vadd.f32 %v1589, %v1352
      %v1591 = vadd.f32 %v1590, %v1360
      %v1592 = vadd.f32 %v1591, %v1368
      %v1593 = vadd.f32 %v1592, %v1376
      %v1594 = vadd.f32 %v1593, %v1384
      %v1595 = vadd.f32 %v1594, %v1392
      %v1596 = vadd.f32 %v1595, %v1400
      %v1597 = vadd.f32 %v1596, %v1408
      %v1598 = vadd.f32 %v1597, %v1416
      %v1599 = vadd.f32 %v1598, %v1424
      %v1600 = vadd.f32 %v1599, %v1432
      %v1601 = vadd.f32 %v1600, %v1440
      %v1602 = vadd.f32 %v1601, %v1448
      %v1603 = vadd.f32 %v1602, %v1456
      %v1604 = vrot.slane %v1603, 4
      %v1605 = vadd.f32 %v1603, %v1604
      %v1606 = vrot.slane %v1605, 2
      %v1607 = vadd.f32 %v1605, %v1606
      %v1608 = vrot.slane %v1607, 1
      %v1609 = vadd.f32 %v1607, %v1608
      %v1610 = vadd.f32 %v1209, %v1217
      %v1611 = vadd.f32 %v1610, %v1225
      %v1612 = vadd.f32 %v1611, %v1233
      %v1613 = vadd.f32 %v1612, %v1241
      %v1614 = vadd.f32 %v1613, %v1249
      %v1615 = vadd.f32 %v1614, %v1257
      %v1616 = vadd.f32 %v1615, %v1265
      %v1617 = vadd.f32 %v1616, %v1273
      %v1618 = vadd.f32 %v1617, %v1281
      %v1619 = vadd.f32 %v1618, %v1289
      %v1620 = vadd.f32 %v1619, %v1297
      %v1621 = vadd.f32 %v1620, %v1305
      %v1622 = vadd.f32 %v1621, %v1313
      %v1623 = vadd.f32 %v1622, %v1321
      %v1624 = vadd.f32 %v1623, %v1329
      %v1625 = vadd.f32 %v1624, %v1337
      %v1626 = vadd.f32 %v1625, %v1345
      %v1627 = vadd.f32 %v1626, %v1353
      %v1628 = vadd.f32 %v1627, %v1361
      %v1629 = vadd.f32 %v1628, %v1369
      %v1630 = vadd.f32 %v1629, %v1377
      %v1631 = vadd.f32 %v1630, %v1385
      %v1632 = vadd.f32 %v1631, %v1393
      %v1633 = vadd.f32 %v1632, %v1401
      %v1634 = vadd.f32 %v1633, %v1409
      %v1635 = vadd.f32 %v1634, %v1417
      %v1636 = vadd.f32 %v1635, %v1425
      %v1637 = vadd.f32 %v1636, %v1433
      %v1638 = vadd.f32 %v1637, %v1441
      %v1639 = vadd.f32 %v1638, %v1449
      %v1640 = vadd.f32 %v1639, %v1457
      %v1641 = vrot.slane %v1640, 4
      %v1642 = vadd.f32 %v1640, %v1641
      %v1643 = vrot.slane %v1642, 2
      %v1644 = vadd.f32 %v1642, %v1643
      %v1645 = vrot.slane %v1644, 1
      %v1646 = vadd.f32 %v1644, %v1645
      %v1647 = vadd.f32 %v1210, %v1218
      %v1648 = vadd.f32 %v1647, %v1226
      %v1649 = vadd.f32 %v1648, %v1234
      %v1650 = vadd.f32 %v1649, %v1242
      %v1651 = vadd.f32 %v1650, %v1250
      %v1652 = vadd.f32 %v1651, %v1258
      %v1653 = vadd.f32 %v1652, %v1266
      %v1654 = vadd.f32 %v1653, %v1274
      %v1655 = vadd.f32 %v1654, %v1282
      %v1656 = vadd.f32 %v1655, %v1290
      %v1657 = vadd.f32 %v1656, %v1298
      %v1658 = vadd.f32 %v1657, %v1306
      %v1659 = vadd.f32 %v1658, %v1314
      %v1660 = vadd.f32 %v1659, %v1322
      %v1661 = vadd.f32 %v1660, %v1330
      %v1662 = vadd.f32 %v1661, %v1338
      %v1663 = vadd.f32 %v1662, %v1346
      %v1664 = vadd.f32 %v1663, %v1354
      %v1665 = vadd.f32 %v1664, %v1362
      %v1666 = vadd.f32 %v1665, %v1370
      %v1667 = vadd.f32 %v1666, %v1378
      %v1668 = vadd.f32 %v1667, %v1386
      %v1669 = vadd.f32 %v1668, %v1394
      %v1670 = vadd.f32 %v1669, %v1402
      %v1671 = vadd.f32 %v1670, %v1410
      %v1672 = vadd.f32 %v1671, %v1418
      %v1673 = vadd.f32 %v1672, %v1426
      %v1674 = vadd.f32 %v1673, %v1434
      %v1675 = vadd.f32 %v1674, %v1442
      %v1676 = vadd.f32 %v1675, %v1450
      %v1677 = vadd.f32 %v1676, %v1458
      %v1678 = vrot.slane %v1677, 4
      %v1679 = vadd.f32 %v1677, %v1678
      %v1680 = vrot.slane %v1679, 2
      %v1681 = vadd.f32 %v1679, %v1680
      %v1682 = vrot.slane %v1681, 1
      %v1683 = vadd.f32 %v1681, %v1682
      %v1684 = vadd.f32 %v1211, %v1219
      %v1685 = vadd.f32 %v1684, %v1227
      %v1686 = vadd.f32 %v1685, %v1235
      %v1687 = vadd.f32 %v1686, %v1243
      %v1688 = vadd.f32 %v1687, %v1251
      %v1689 = vadd.f32 %v1688, %v1259
      %v1690 = vadd.f32 %v1689, %v1267
      %v1691 = vadd.f32 %v1690, %v1275
      %v1692 = vadd.f32 %v1691, %v1283
      %v1693 = vadd.f32 %v1692, %v1291
      %v1694 = vadd.f32 %v1693, %v1299
      %v1695 = vadd.f32 %v1694, %v1307
      %v1696 = vadd.f32 %v1695, %v1315
      %v1697 = vadd.f32 %v1696, %v1323
      %v1698 = vadd.f32 %v1697, %v1331
      %v1699 = vadd.f32 %v1698, %v1339
      %v1700 = vadd.f32 %v1699, %v1347
      %v1701 = vadd.f32 %v1700, %v1355
      %v1702 = vadd.f32 %v1701, %v1363
      %v1703 = vadd.f32 %v1702, %v1371
      %v1704 = vadd.f32 %v1703, %v1379
      %v1705 = vadd.f32 %v1704, %v1387
      %v1706 = vadd.f32 %v1705, %v1395
      %v1707 = vadd.f32 %v1706, %v1403
      %v1708 = vadd.f32 %v1707, %v1411
      %v1709 = vadd.f32 %v1708, %v1419
      %v1710 = vadd.f32 %v1709, %v1427
      %v1711 = vadd.f32 %v1710, %v1435
      %v1712 = vadd.f32 %v1711, %v1443
      %v1713 = vadd.f32 %v1712, %v1451
      %v1714 = vadd.f32 %v1713, %v1459
      %v1715 = vrot.slane %v1714, 4
      %v1716 = vadd.f32 %v1714, %v1715
      %v1717 = vrot.slane %v1716, 2
      %v1718 = vadd.f32 %v1716, %v1717
      %v1719 = vrot.slane %v1718, 1
      %v1720 = vadd.f32 %v1718, %v1719
      %v1721 = vadd.f32 %v1212, %v1220
      %v1722 = vadd.f32 %v1721, %v1228
      %v1723 = vadd.f32 %v1722, %v1236
      %v1724 = vadd.f32 %v1723, %v1244
      %v1725 = vadd.f32 %v1724, %v1252
      %v1726 = vadd.f32 %v1725, %v1260
      %v1727 = vadd.f32 %v1726, %v1268
      %v1728 = vadd.f32 %v1727, %v1276
      %v1729 = vadd.f32 %v1728, %v1284
      %v1730 = vadd.f32 %v1729, %v1292
      %v1731 = vadd.f32 %v1730, %v1300
      %v1732 = vadd.f32 %v1731, %v1308
      %v1733 = vadd.f32 %v1732, %v1316
      %v1734 = vadd.f32 %v1733, %v1324
      %v1735 = vadd.f32 %v1734, %v1332
      %v1736 = vadd.f32 %v1735, %v1340
      %v1737 = vadd.f32 %v1736, %v1348
      %v1738 = vadd.f32 %v1737, %v1356
      %v1739 = vadd.f32 %v1738, %v1364
      %v1740 = vadd.f32 %v1739, %v1372
      %v1741 = vadd.f32 %v1740, %v1380
      %v1742 = vadd.f32 %v1741, %v1388
      %v1743 = vadd.f32 %v1742, %v1396
      %v1744 = vadd.f32 %v1743, %v1404
      %v1745 = vadd.f32 %v1744, %v1412
      %v1746 = vadd.f32 %v1745, %v1420
      %v1747 = vadd.f32 %v1746, %v1428
      %v1748 = vadd.f32 %v1747, %v1436
      %v1749 = vadd.f32 %v1748, %v1444
      %v1750 = vadd.f32 %v1749, %v1452
      %v1751 = vadd.f32 %v1750, %v1460
      %v1752 = vrot.slane %v1751, 4
      %v1753 = vadd.f32 %v1751, %v1752
      %v1754 = vrot.slane %v1753, 2
      %v1755 = vadd.f32 %v1753, %v1754
      %v1756 = vrot.slane %v1755, 1
      %v1757 = vadd.f32 %v1755, %v1756
      %v1766 = vcombine.low %v1498, %v1535
      %v1767 = vcombine.low %v1572, %v1609
      %v1768 = vcombine.low %v1646, %v1683
      %v1769 = vcombine.low %v1720, %v1757
      %v1771 = vunpack.c.l.s4 1966171168
      %v1772 = vunpack.c.0.s8 %v1771
      %v1773 = vlaneseq
      %v1774 = vshrl.u32 %v1773, 7
      %v1775 = vsub.s32 %v1772, %v1774
      %v1776 = vrot.slane %v1766, %v1775
      %v1778 = vunpack.c.l.s4 1966171168
      %v1779 = vunpack.c.0.s8 %v1778
      %v1780 = vlaneseq
      %v1781 = vshrl.u32 %v1780, 7
      %v1782 = vsub.s32 %v1779, %v1781
      %v1783 = vrot.slane %v1767, %v1782
      %v1785 = vunpack.c.l.s4 1966171168
      %v1786 = vunpack.c.0.s8 %v1785
      %v1787 = vlaneseq
      %v1788 = vshrl.u32 %v1787, 7
      %v1789 = vsub.s32 %v1786, %v1788
      %v1790 = vrot.slane %v1768, %v1789
      %v1792 = vunpack.c.l.s4 1966171168
      %v1793 = vunpack.c.0.s8 %v1792
      %v1794 = vlaneseq
      %v1795 = vshrl.u32 %v1794, 7
      %v1796 = vsub.s32 %v1793, %v1795
      %v1797 = vrot.slane %v1769, %v1796
      %v1798 = vcombine.low %v1776, %v1783
      %v1799 = vcombine.low %v1790, %v1797
      %v1801 = vunpack.c.l.s4 1966171168
      %v1802 = vunpack.c.0.s8 %v1801
      %v1803 = vlaneseq
      %v1804 = vshrl.u32 %v1803, 7
      %v1805 = vsub.s32 %v1802, %v1804
      %v1806 = vrot.slane %v1798, %v1805
      %v1808 = vunpack.c.l.s4 1966171168
      %v1809 = vunpack.c.0.s8 %v1808
      %v1810 = vlaneseq
      %v1811 = vshrl.u32 %v1810, 7
      %v1812 = vsub.s32 %v1809, %v1811
      %v1813 = vrot.slane %v1799, %v1812
      %v1814 = vcombine.low %v1806, %v1813
      %v1816 = vadd.f32 %v1461, %v1814
      %1817 = vst [vmem:[%s169] sm:$0xff] %v1816
      // Predicated region
      $region33: #{network_forward.2} parent=27 // pred_check
        %p1818 = pneg %p171
      $region34: #{network_forward.2} parent=27 // pred_check_branch
        %1820 = sbr.rel (%p1818) target = $region36
      $region35: #{network_forward.2} parent=27 // pred_region
        %v1821 = vld [vmem:[%s169] sm:$0xff]
        %v1822 = vmul.f32 %v1821, 0.00390625
        %1823 = vst [vmem:[%s169] sm:$0xff] %v1822
      $region36: #{network_forward.2} parent=27 // pred_fallthru
        _
      %p1824 = scmp.lt.s32.totalorder %s17, 1
      %s1825 = scalar_select %p1824, %s17, 1
      %s1826 = smul.addr %s1825, 8
      %s1827 = scalar_lea.vmem %s2, %s1826
      // Predicated region
      $region37: #{network_forward.2} parent=27 // pred_check
        %p1828 = pneg %p92
      $region38: #{network_forward.2} parent=27 // pred_check_branch
        %1830 = sbr.rel (%p1828) target = $region40
      $region39: #{network_forward.2} parent=27 // pred_region
        _
      $region40: #{network_forward.2} parent=27 // pred_fallthru
        _
    $region28: #{network_forward.2} parent=5 // pred_fallthru
      _
    %p1831 = scmp.le.s32.totalorder 2, %s8
    // Predicated region
    $region41: #{network_forward.2} parent=5 // pred_check
      %p1832 = pneg %p1831
    $region42: #{network_forward.2} parent=5 // pred_check_branch
      %1834 = sbr.rel (%p1832) target = $region44
    $region43: #{network_forward.2} parent=5 // pred_region
      %s1835 = ssub.s32 %s8, 2
      // Predicated region
      $region45: #{network_forward.2} parent=43 // pred_check
        %p1836 = pneg %p98
      $region46: #{network_forward.2} parent=43 // pred_check_branch
        %1838 = sbr.rel (%p1836) target = $region48
      $region47: #{network_forward.2} parent=43 // pred_region
        %p1839 = scmp.lt.s32.totalorder %s19, 1
        %s1840 = scalar_select %p1839, %s19, 1
        %s1841 = smul.addr %s1840, 8
        %s1842 = scalar_lea.vmem %s2, %s1841
      $region48: #{network_forward.2} parent=43 // pred_fallthru
        _
    $region44: #{network_forward.2} parent=5 // pred_fallthru
      _
  $region6: #{network_forward.2} parent=0 // loop_footer
    %s12 = sadd.s32 1, %s8
  $region7: #{network_forward.2} parent=0 // loop_footer_branch
    %7 = sbr.rel target = $region3
  $region8: #{network_forward.2} parent=0 // loop_exit
    _

// kernel: network_forward.3
$region0: #{network_forward.3}
  #allocation0 [shape = 'u32[]', space=smem, size = 0x4, offset = 0x4, fixed_abs, tag = 'smem constant byte address 0x4 - core index']
  #allocation1 [shape = 'u32[144,128]{1,0:T(1,128)}', space=vmem, size = 0x12000, scoped, tag = 'internal scratch']
  %s0 = inlined_call_operand.vmem [shape: f32[2,1024], index: 0, kind: input, shape index: {}]
  %s1 = inlined_call_operand.vmem [shape: bf16[1024,128], index: 1, kind: input, shape index: {}]
  %s2 = inlined_call_operand.vmem [shape: f32[1,128], index: 2, kind: input, shape index: {}]
  %s3 = inlined_call_operand.vmem [shape: f32[128,128], index: 3, kind: input, shape index: {}]
  %s4 = inlined_call_operand.vmem [shape: f32[2,128], index: 4, kind: output, shape index: {}]
  %s5 = sld [smem:[#allocation0]]
  $region26: #{network_forward.3} parent=0
    _
  %s7 = ssub.s32 1, %s5
  %s8 = scalar_select 0, %s7, %s5
  // Predicated region
  $region2: #{network_forward.3} parent=0 // pred_check
    _
  $region3: #{network_forward.3} parent=0 // pred_check_branch
    %10 = sbr.rel (0) target = $region5
  $region4: #{network_forward.3} parent=0 // pred_region
    _
  $region5: #{network_forward.3} parent=0 // pred_fallthru
    _
  // Predicated region
  $region6: #{network_forward.3} parent=0 // pred_check
    _
  $region7: #{network_forward.3} parent=0 // pred_check_branch
    %12 = sbr.rel (0) target = $region9
  $region8: #{network_forward.3} parent=0 // pred_region
    _
  $region9: #{network_forward.3} parent=0 // pred_fallthru
    _
  // Predicated region
  $region10: #{network_forward.3} parent=0 // pred_check
    _
  $region11: #{network_forward.3} parent=0 // pred_check_branch
    %14 = sbr.rel (0) target = $region13
  $region12: #{network_forward.3} parent=0 // pred_region
    _
  $region13: #{network_forward.3} parent=0 // pred_fallthru
    _
  // Predicated region
  $region14: #{network_forward.3} parent=0 // pred_check
    _
  $region15: #{network_forward.3} parent=0 // pred_check_branch
    %16 = sbr.rel (0) target = $region17
  $region16: #{network_forward.3} parent=0 // pred_region
    _
  $region17: #{network_forward.3} parent=0 // pred_fallthru
    _
  %v18 = vld [vmem:[%s0] sm:$0xff]
  %v19 = vld [vmem:[%s0 + $0x8] sm:$0xff]
  %v22 = vcombine.high %v18, %v18
  %v24 = vunpack.c.l.s4 1983009808
  %v25 = vunpack.c.0.s8 %v24
  %v26 = vlaneseq
  %v27 = vshrl.u32 %v26, 7
  %v28 = vsub.s32 %v25, %v27
  %v29 = vrot.slane %v18, %v28
  %v31 = vunpack.c.l.s4 1983009808
  %v32 = vunpack.c.0.s8 %v31
  %v33 = vlaneseq
  %v34 = vshrl.u32 %v33, 7
  %v35 = vsub.s32 %v32, %v34
  %v36 = vrot.slane %v22, %v35
  %v37 = vcombine.high %v29, %v29
  %v38 = vcombine.high %v36, %v36
  %v39 = vcombine.high %v19, %v19
  %v41 = vunpack.c.l.s4 1983009808
  %v42 = vunpack.c.0.s8 %v41
  %v43 = vlaneseq
  %v44 = vshrl.u32 %v43, 7
  %v45 = vsub.s32 %v42, %v44
  %v46 = vrot.slane %v19, %v45
  %v48 = vunpack.c.l.s4 1983009808
  %v49 = vunpack.c.0.s8 %v48
  %v50 = vlaneseq
  %v51 = vshrl.u32 %v50, 7
  %v52 = vsub.s32 %v49, %v51
  %v53 = vrot.slane %v39, %v52
  %v54 = vcombine.high %v46, %v46
  %v55 = vcombine.high %v53, %v53
  %v64 = vpack.c.bf16 %v29, %v29
  %v65 = vpack.c.bf16 %v37, %v37
  %v66 = vpack.c.bf16 %v36, %v36
  %v67 = vpack.c.bf16 %v38, %v38
  %v68 = vpack.c.bf16 %v46, %v46
  %v69 = vpack.c.bf16 %v54, %v54
  %v70 = vpack.c.bf16 %v53, %v53
  %v71 = vpack.c.bf16 %v55, %v55
  %v72 = vld [vmem:[%s1] sm:$0xf]
  %v73 = vld [vmem:[%s1 + $0x4] sm:$0xf]
  %v74 = vld [vmem:[%s1 + $0x8] sm:$0xf]
  %v75 = vld [vmem:[%s1 + $0xc] sm:$0xf]
  %v76 = vld [vmem:[%s1 + $0x10] sm:$0xf]
  %v77 = vld [vmem:[%s1 + $0x14] sm:$0xf]
  %v78 = vld [vmem:[%s1 + $0x18] sm:$0xf]
  %v79 = vld [vmem:[%s1 + $0x1c] sm:$0xf]
  %v80 = vld [vmem:[%s1 + $0x20] sm:$0xf]
  %v81 = vld [vmem:[%s1 + $0x24] sm:$0xf]
  %v82 = vld [vmem:[%s1 + $0x28] sm:$0xf]
  %v83 = vld [vmem:[%s1 + $0x2c] sm:$0xf]
  %v84 = vld [vmem:[%s1 + $0x30] sm:$0xf]
  %v85 = vld [vmem:[%s1 + $0x34] sm:$0xf]
  %v86 = vld [vmem:[%s1 + $0x38] sm:$0xf]
  %v87 = vld [vmem:[%s1 + $0x3c] sm:$0xf]
  %v88 = vld [vmem:[%s1 + $0x40] sm:$0xf]
  %v89 = vld [vmem:[%s1 + $0x44] sm:$0xf]
  %v90 = vld [vmem:[%s1 + $0x48] sm:$0xf]
  %v91 = vld [vmem:[%s1 + $0x4c] sm:$0xf]
  %v92 = vld [vmem:[%s1 + $0x50] sm:$0xf]
  %v93 = vld [vmem:[%s1 + $0x54] sm:$0xf]
  %v94 = vld [vmem:[%s1 + $0x58] sm:$0xf]
  %v95 = vld [vmem:[%s1 + $0x5c] sm:$0xf]
  %v96 = vld [vmem:[%s1 + $0x60] sm:$0xf]
  %v97 = vld [vmem:[%s1 + $0x64] sm:$0xf]
  %v98 = vld [vmem:[%s1 + $0x68] sm:$0xf]
  %v99 = vld [vmem:[%s1 + $0x6c] sm:$0xf]
  %v100 = vld [vmem:[%s1 + $0x70] sm:$0xf]
  %v101 = vld [vmem:[%s1 + $0x74] sm:$0xf]
  %v102 = vld [vmem:[%s1 + $0x78] sm:$0xf]
  %v103 = vld [vmem:[%s1 + $0x7c] sm:$0xf]
  %v104 = vld [vmem:[%s1 + $0x80] sm:$0xf]
  %v105 = vld [vmem:[%s1 + $0x84] sm:$0xf]
  %v106 = vld [vmem:[%s1 + $0x88] sm:$0xf]
  %v107 = vld [vmem:[%s1 + $0x8c] sm:$0xf]
  %v108 = vld [vmem:[%s1 + $0x90] sm:$0xf]
  %v109 = vld [vmem:[%s1 + $0x94] sm:$0xf]
  %v110 = vld [vmem:[%s1 + $0x98] sm:$0xf]
  %v111 = vld [vmem:[%s1 + $0x9c] sm:$0xf]
  %v112 = vld [vmem:[%s1 + $0xa0] sm:$0xf]
  %v113 = vld [vmem:[%s1 + $0xa4] sm:$0xf]
  %v114 = vld [vmem:[%s1 + $0xa8] sm:$0xf]
  %v115 = vld [vmem:[%s1 + $0xac] sm:$0xf]
  %v116 = vld [vmem:[%s1 + $0xb0] sm:$0xf]
  %v117 = vld [vmem:[%s1 + $0xb4] sm:$0xf]
  %v118 = vld [vmem:[%s1 + $0xb8] sm:$0xf]
  %v119 = vld [vmem:[%s1 + $0xbc] sm:$0xf]
  %v120 = vld [vmem:[%s1 + $0xc0] sm:$0xf]
  %v121 = vld [vmem:[%s1 + $0xc4] sm:$0xf]
  %v122 = vld [vmem:[%s1 + $0xc8] sm:$0xf]
  %v123 = vld [vmem:[%s1 + $0xcc] sm:$0xf]
  %v124 = vld [vmem:[%s1 + $0xd0] sm:$0xf]
  %v125 = vld [vmem:[%s1 + $0xd4] sm:$0xf]
  %v126 = vld [vmem:[%s1 + $0xd8] sm:$0xf]
  %v127 = vld [vmem:[%s1 + $0xdc] sm:$0xf]
  %v128 = vld [vmem:[%s1 + $0xe0] sm:$0xf]
  %v129 = vld [vmem:[%s1 + $0xe4] sm:$0xf]
  %v130 = vld [vmem:[%s1 + $0xe8] sm:$0xf]
  %v131 = vld [vmem:[%s1 + $0xec] sm:$0xf]
  %v132 = vld [vmem:[%s1 + $0xf0] sm:$0xf]
  %v133 = vld [vmem:[%s1 + $0xf4] sm:$0xf]
  %v134 = vld [vmem:[%s1 + $0xf8] sm:$0xf]
  %v135 = vld [vmem:[%s1 + $0xfc] sm:$0xf]
  %v136 = vld [vmem:[%s1 + $0x100] sm:$0xf]
  %v137 = vld [vmem:[%s1 + $0x104] sm:$0xf]
  %v138 = vld [vmem:[%s1 + $0x108] sm:$0xf]
  %v139 = vld [vmem:[%s1 + $0x10c] sm:$0xf]
  %v140 = vld [vmem:[%s1 + $0x110] sm:$0xf]
  %v141 = vld [vmem:[%s1 + $0x114] sm:$0xf]
  %v142 = vld [vmem:[%s1 + $0x118] sm:$0xf]
  %v143 = vld [vmem:[%s1 + $0x11c] sm:$0xf]
  %v144 = vld [vmem:[%s1 + $0x120] sm:$0xf]
  %v145 = vld [vmem:[%s1 + $0x124] sm:$0xf]
  %v146 = vld [vmem:[%s1 + $0x128] sm:$0xf]
  %v147 = vld [vmem:[%s1 + $0x12c] sm:$0xf]
  %v148 = vld [vmem:[%s1 + $0x130] sm:$0xf]
  %v149 = vld [vmem:[%s1 + $0x134] sm:$0xf]
  %v150 = vld [vmem:[%s1 + $0x138] sm:$0xf]
  %v151 = vld [vmem:[%s1 + $0x13c] sm:$0xf]
  %v152 = vld [vmem:[%s1 + $0x140] sm:$0xf]
  %v153 = vld [vmem:[%s1 + $0x144] sm:$0xf]
  %v154 = vld [vmem:[%s1 + $0x148] sm:$0xf]
  %v155 = vld [vmem:[%s1 + $0x14c] sm:$0xf]
  %v156 = vld [vmem:[%s1 + $0x150] sm:$0xf]
  %v157 = vld [vmem:[%s1 + $0x154] sm:$0xf]
  %v158 = vld [vmem:[%s1 + $0x158] sm:$0xf]
  %v159 = vld [vmem:[%s1 + $0x15c] sm:$0xf]
  %v160 = vld [vmem:[%s1 + $0x160] sm:$0xf]
  %v161 = vld [vmem:[%s1 + $0x164] sm:$0xf]
  %v162 = vld [vmem:[%s1 + $0x168] sm:$0xf]
  %v163 = vld [vmem:[%s1 + $0x16c] sm:$0xf]
  %v164 = vld [vmem:[%s1 + $0x170] sm:$0xf]
  %v165 = vld [vmem:[%s1 + $0x174] sm:$0xf]
  %v166 = vld [vmem:[%s1 + $0x178] sm:$0xf]
  %v167 = vld [vmem:[%s1 + $0x17c] sm:$0xf]
  %v168 = vld [vmem:[%s1 + $0x180] sm:$0xf]
  %v169 = vld [vmem:[%s1 + $0x184] sm:$0xf]
  %v170 = vld [vmem:[%s1 + $0x188] sm:$0xf]
  %v171 = vld [vmem:[%s1 + $0x18c] sm:$0xf]
  %v172 = vld [vmem:[%s1 + $0x190] sm:$0xf]
  %v173 = vld [vmem:[%s1 + $0x194] sm:$0xf]
  %v174 = vld [vmem:[%s1 + $0x198] sm:$0xf]
  %v175 = vld [vmem:[%s1 + $0x19c] sm:$0xf]
  %v176 = vld [vmem:[%s1 + $0x1a0] sm:$0xf]
  %v177 = vld [vmem:[%s1 + $0x1a4] sm:$0xf]
  %v178 = vld [vmem:[%s1 + $0x1a8] sm:$0xf]
  %v179 = vld [vmem:[%s1 + $0x1ac] sm:$0xf]
  %v180 = vld [vmem:[%s1 + $0x1b0] sm:$0xf]
  %v181 = vld [vmem:[%s1 + $0x1b4] sm:$0xf]
  %v182 = vld [vmem:[%s1 + $0x1b8] sm:$0xf]
  %v183 = vld [vmem:[%s1 + $0x1bc] sm:$0xf]
  %v184 = vld [vmem:[%s1 + $0x1c0] sm:$0xf]
  %v185 = vld [vmem:[%s1 + $0x1c4] sm:$0xf]
  %v186 = vld [vmem:[%s1 + $0x1c8] sm:$0xf]
  %v187 = vld [vmem:[%s1 + $0x1cc] sm:$0xf]
  %v188 = vld [vmem:[%s1 + $0x1d0] sm:$0xf]
  %v189 = vld [vmem:[%s1 + $0x1d4] sm:$0xf]
  %v190 = vld [vmem:[%s1 + $0x1d8] sm:$0xf]
  %v191 = vld [vmem:[%s1 + $0x1dc] sm:$0xf]
  %v192 = vld [vmem:[%s1 + $0x1e0] sm:$0xf]
  %v193 = vld [vmem:[%s1 + $0x1e4] sm:$0xf]
  %v194 = vld [vmem:[%s1 + $0x1e8] sm:$0xf]
  %v195 = vld [vmem:[%s1 + $0x1ec] sm:$0xf]
  %v196 = vld [vmem:[%s1 + $0x1f0] sm:$0xf]
  %v197 = vld [vmem:[%s1 + $0x1f4] sm:$0xf]
  %v198 = vld [vmem:[%s1 + $0x1f8] sm:$0xf]
  %v199 = vld [vmem:[%s1 + $0x1fc] sm:$0xf]
  %v200 = vld [vmem:[%s2] sm:$0x1]
  %v202 = vlaneseq
  %v203 = vshrl.u32 %v202, 7
  %v204 = vsub.s32 0, %v203
  %v205 = vrot.slane %v200, %v204
  %v335 = vunpack.c.l.b16 %v72
  %v336 = vunpack.c.l.b16 %v73
  %v337 = vunpack.c.l.b16 %v74
  %v338 = vunpack.c.l.b16 %v75
  %v339 = vunpack.c.l.b16 %v76
  %v340 = vunpack.c.l.b16 %v77
  %v341 = vunpack.c.l.b16 %v78
  %v342 = vunpack.c.l.b16 %v79
  %v343 = vunpack.c.l.b16 %v80
  %v344 = vunpack.c.l.b16 %v81
  %v345 = vunpack.c.l.b16 %v82
  %v346 = vunpack.c.l.b16 %v83
  %v347 = vunpack.c.l.b16 %v84
  %v348 = vunpack.c.l.b16 %v85
  %v349 = vunpack.c.l.b16 %v86
  %v350 = vunpack.c.l.b16 %v87
  %v351 = vunpack.c.l.b16 %v88
  %v352 = vunpack.c.l.b16 %v89
  %v353 = vunpack.c.l.b16 %v90
  %v354 = vunpack.c.l.b16 %v91
  %v355 = vunpack.c.l.b16 %v92
  %v356 = vunpack.c.l.b16 %v93
  %v357 = vunpack.c.l.b16 %v94
  %v358 = vunpack.c.l.b16 %v95
  %v359 = vunpack.c.l.b16 %v96
  %v360 = vunpack.c.l.b16 %v97
  %v361 = vunpack.c.l.b16 %v98
  %v362 = vunpack.c.l.b16 %v99
  %v363 = vunpack.c.l.b16 %v100
  %v364 = vunpack.c.l.b16 %v101
  %v365 = vunpack.c.l.b16 %v102
  %v366 = vunpack.c.l.b16 %v103
  %v367 = vunpack.c.l.b16 %v104
  %v368 = vunpack.c.l.b16 %v105
  %v369 = vunpack.c.l.b16 %v106
  %v370 = vunpack.c.l.b16 %v107
  %v371 = vunpack.c.l.b16 %v108
  %v372 = vunpack.c.l.b16 %v109
  %v373 = vunpack.c.l.b16 %v110
  %v374 = vunpack.c.l.b16 %v111
  %v375 = vunpack.c.l.b16 %v112
  %v376 = vunpack.c.l.b16 %v113
  %v377 = vunpack.c.l.b16 %v114
  %v378 = vunpack.c.l.b16 %v115
  %v379 = vunpack.c.l.b16 %v116
  %v380 = vunpack.c.l.b16 %v117
  %v381 = vunpack.c.l.b16 %v118
  %v382 = vunpack.c.l.b16 %v119
  %v383 = vunpack.c.l.b16 %v120
  %v384 = vunpack.c.l.b16 %v121
  %v385 = vunpack.c.l.b16 %v122
  %v386 = vunpack.c.l.b16 %v123
  %v387 = vunpack.c.l.b16 %v124
  %v388 = vunpack.c.l.b16 %v125
  %v389 = vunpack.c.l.b16 %v126
  %v390 = vunpack.c.l.b16 %v127
  %v391 = vunpack.c.l.b16 %v128
  %v392 = vunpack.c.l.b16 %v129
  %v393 = vunpack.c.l.b16 %v130
  %v394 = vunpack.c.l.b16 %v131
  %v395 = vunpack.c.l.b16 %v132
  %v396 = vunpack.c.l.b16 %v133
  %v397 = vunpack.c.l.b16 %v134
  %v398 = vunpack.c.l.b16 %v135
  %v399 = vunpack.c.l.b16 %v136
  %v400 = vunpack.c.l.b16 %v137
  %v401 = vunpack.c.l.b16 %v138
  %v402 = vunpack.c.l.b16 %v139
  %v403 = vunpack.c.l.b16 %v140
  %v404 = vunpack.c.l.b16 %v141
  %v405 = vunpack.c.l.b16 %v142
  %v406 = vunpack.c.l.b16 %v143
  %v407 = vunpack.c.l.b16 %v144
  %v408 = vunpack.c.l.b16 %v145
  %v409 = vunpack.c.l.b16 %v146
  %v410 = vunpack.c.l.b16 %v147
  %v411 = vunpack.c.l.b16 %v148
  %v412 = vunpack.c.l.b16 %v149
  %v413 = vunpack.c.l.b16 %v150
  %v414 = vunpack.c.l.b16 %v151
  %v415 = vunpack.c.l.b16 %v152
  %v416 = vunpack.c.l.b16 %v153
  %v417 = vunpack.c.l.b16 %v154
  %v418 = vunpack.c.l.b16 %v155
  %v419 = vunpack.c.l.b16 %v156
  %v420 = vunpack.c.l.b16 %v157
  %v421 = vunpack.c.l.b16 %v158
  %v422 = vunpack.c.l.b16 %v159
  %v423 = vunpack.c.l.b16 %v160
  %v424 = vunpack.c.l.b16 %v161
  %v425 = vunpack.c.l.b16 %v162
  %v426 = vunpack.c.l.b16 %v163
  %v427 = vunpack.c.l.b16 %v164
  %v428 = vunpack.c.l.b16 %v165
  %v429 = vunpack.c.l.b16 %v166
  %v430 = vunpack.c.l.b16 %v167
  %v431 = vunpack.c.l.b16 %v168
  %v432 = vunpack.c.l.b16 %v169
  %v433 = vunpack.c.l.b16 %v170
  %v434 = vunpack.c.l.b16 %v171
  %v435 = vunpack.c.l.b16 %v172
  %v436 = vunpack.c.l.b16 %v173
  %v437 = vunpack.c.l.b16 %v174
  %v438 = vunpack.c.l.b16 %v175
  %v439 = vunpack.c.l.b16 %v176
  %v440 = vunpack.c.l.b16 %v177
  %v441 = vunpack.c.l.b16 %v178
  %v442 = vunpack.c.l.b16 %v179
  %v443 = vunpack.c.l.b16 %v180
  %v444 = vunpack.c.l.b16 %v181
  %v445 = vunpack.c.l.b16 %v182
  %v446 = vunpack.c.l.b16 %v183
  %v447 = vunpack.c.l.b16 %v184
  %v448 = vunpack.c.l.b16 %v185
  %v449 = vunpack.c.l.b16 %v186
  %v450 = vunpack.c.l.b16 %v187
  %v451 = vunpack.c.l.b16 %v188
  %v452 = vunpack.c.l.b16 %v189
  %v453 = vunpack.c.l.b16 %v190
  %v454 = vunpack.c.l.b16 %v191
  %v455 = vunpack.c.l.b16 %v192
  %v456 = vunpack.c.l.b16 %v193
  %v457 = vunpack.c.l.b16 %v194
  %v458 = vunpack.c.l.b16 %v195
  %v459 = vunpack.c.l.b16 %v196
  %v460 = vunpack.c.l.b16 %v197
  %v461 = vunpack.c.l.b16 %v198
  %v462 = vunpack.c.l.b16 %v199
  %v463 = vpack.c.b16 %v336, %v335
  %v464 = vpack.c.b16 %v338, %v337
  %v465 = vpack.c.b16 %v340, %v339
  %v466 = vpack.c.b16 %v342, %v341
  %v467 = vpack.c.b16 %v344, %v343
  %v468 = vpack.c.b16 %v346, %v345
  %v469 = vpack.c.b16 %v348, %v347
  %v470 = vpack.c.b16 %v350, %v349
  %v471 = vpack.c.b16 %v352, %v351
  %v472 = vpack.c.b16 %v354, %v353
  %v473 = vpack.c.b16 %v356, %v355
  %v474 = vpack.c.b16 %v358, %v357
  %v475 = vpack.c.b16 %v360, %v359
  %v476 = vpack.c.b16 %v362, %v361
  %v477 = vpack.c.b16 %v364, %v363
  %v478 = vpack.c.b16 %v366, %v365
  %v479 = vpack.c.b16 %v368, %v367
  %v480 = vpack.c.b16 %v370, %v369
  %v481 = vpack.c.b16 %v372, %v371
  %v482 = vpack.c.b16 %v374, %v373
  %v483 = vpack.c.b16 %v376, %v375
  %v484 = vpack.c.b16 %v378, %v377
  %v485 = vpack.c.b16 %v380, %v379
  %v486 = vpack.c.b16 %v382, %v381
  %v487 = vpack.c.b16 %v384, %v383
  %v488 = vpack.c.b16 %v386, %v385
  %v489 = vpack.c.b16 %v388, %v387
  %v490 = vpack.c.b16 %v390, %v389
  %v491 = vpack.c.b16 %v392, %v391
  %v492 = vpack.c.b16 %v394, %v393
  %v493 = vpack.c.b16 %v396, %v395
  %v494 = vpack.c.b16 %v398, %v397
  %v495 = vpack.c.b16 %v400, %v399
  %v496 = vpack.c.b16 %v402, %v401
  %v497 = vpack.c.b16 %v404, %v403
  %v498 = vpack.c.b16 %v406, %v405
  %v499 = vpack.c.b16 %v408, %v407
  %v500 = vpack.c.b16 %v410, %v409
  %v501 = vpack.c.b16 %v412, %v411
  %v502 = vpack.c.b16 %v414, %v413
  %v503 = vpack.c.b16 %v416, %v415
  %v504 = vpack.c.b16 %v418, %v417
  %v505 = vpack.c.b16 %v420, %v419
  %v506 = vpack.c.b16 %v422, %v421
  %v507 = vpack.c.b16 %v424, %v423
  %v508 = vpack.c.b16 %v426, %v425
  %v509 = vpack.c.b16 %v428, %v427
  %v510 = vpack.c.b16 %v430, %v429
  %v511 = vpack.c.b16 %v432, %v431
  %v512 = vpack.c.b16 %v434, %v433
  %v513 = vpack.c.b16 %v436, %v435
  %v514 = vpack.c.b16 %v438, %v437
  %v515 = vpack.c.b16 %v440, %v439
  %v516 = vpack.c.b16 %v442, %v441
  %v517 = vpack.c.b16 %v444, %v443
  %v518 = vpack.c.b16 %v446, %v445
  %v519 = vpack.c.b16 %v448, %v447
  %v520 = vpack.c.b16 %v450, %v449
  %v521 = vpack.c.b16 %v452, %v451
  %v522 = vpack.c.b16 %v454, %v453
  %v523 = vpack.c.b16 %v456, %v455
  %v524 = vpack.c.b16 %v458, %v457
  %v525 = vpack.c.b16 %v460, %v459
  %v526 = vpack.c.b16 %v462, %v461
  %591 = vmatprep.subr.bf16.mxu0 0
  %592 = vmatpush1.bf16.msra.mxu0 %v463
  %593 = vmatprep.subr.bf16.mxu0 0
  %594 = vmatpush1.bf16.msra.mxu0 %v464
  %595 = vmatprep.subr.bf16.mxu0 0
  %596 = vmatpush1.bf16.msra.mxu0 %v465
  %597 = vmatprep.subr.bf16.mxu0 0
  %598 = vmatpush1.bf16.msra.mxu0 %v466
  %599 = vmatprep.subr.bf16.mxu0 0
  %600 = vmatpush1.bf16.msra.mxu0 %v467
  %601 = vmatprep.subr.bf16.mxu0 0
  %602 = vmatpush1.bf16.msra.mxu0 %v468
  %603 = vmatprep.subr.bf16.mxu0 0
  %604 = vmatpush1.bf16.msra.mxu0 %v469
  %605 = vmatprep.subr.bf16.mxu0 0
  %606 = vmatpush1.bf16.msra.mxu0 %v470
  %607 = vmatprep.subr.bf16.mxu0 0
  %608 = vmatpush1.bf16.msra.mxu0 %v471
  %609 = vmatprep.subr.bf16.mxu0 0
  %610 = vmatpush1.bf16.msra.mxu0 %v472
  %611 = vmatprep.subr.bf16.mxu0 0
  %612 = vmatpush1.bf16.msra.mxu0 %v473
  %613 = vmatprep.subr.bf16.mxu0 0
  %614 = vmatpush1.bf16.msra.mxu0 %v474
  %615 = vmatprep.subr.bf16.mxu0 0
  %616 = vmatpush1.bf16.msra.mxu0 %v475
  %617 = vmatprep.subr.bf16.mxu0 0
  %618 = vmatpush1.bf16.msra.mxu0 %v476
  %619 = vmatprep.subr.bf16.mxu0 0
  %620 = vmatpush1.bf16.msra.mxu0 %v477
  %621 = vmatprep.subr.bf16.mxu0 0
  %622 = vmatpush1.bf16.msra.mxu0 %v478
  %623 = vmatprep.mubr.bf16.mxu0 %v65
  %624 = vmatmul.mubr.bf16.gmra.mrb[0].mxu0 %v64
  %v625 = vpop.f32.mrb[0].mxu0
  %v626 = vadd.f32 %v205, %v625
  %v627 = vpop.f32.mrb[0].mxu0
  %v628 = vpop.f32.mrb[0].mxu0
  %v629 = vpop.f32.mrb[0].mxu0
  %630 = vdwg.mxu0
  %631 = vmatprep.subr.bf16.mxu0 0
  %632 = vmatpush1.bf16.msra.mxu0 %v479
  %633 = vmatprep.subr.bf16.mxu0 0
  %634 = vmatpush1.bf16.msra.mxu0 %v480
  %635 = vmatprep.subr.bf16.mxu0 0
  %636 = vmatpush1.bf16.msra.mxu0 %v481
  %637 = vmatprep.subr.bf16.mxu0 0
  %638 = vmatpush1.bf16.msra.mxu0 %v482
  %639 = vmatprep.subr.bf16.mxu0 0
  %640 = vmatpush1.bf16.msra.mxu0 %v483
  %641 = vmatprep.subr.bf16.mxu0 0
  %642 = vmatpush1.bf16.msra.mxu0 %v484
  %643 = vmatprep.subr.bf16.mxu0 0
  %644 = vmatpush1.bf16.msra.mxu0 %v485
  %645 = vmatprep.subr.bf16.mxu0 0
  %646 = vmatpush1.bf16.msra.mxu0 %v486
  %647 = vmatprep.subr.bf16.mxu0 0
  %648 = vmatpush1.bf16.msra.mxu0 %v487
  %649 = vmatprep.subr.bf16.mxu0 0
  %650 = vmatpush1.bf16.msra.mxu0 %v488
  %651 = vmatprep.subr.bf16.mxu0 0
  %652 = vmatpush1.bf16.msra.mxu0 %v489
  %653 = vmatprep.subr.bf16.mxu0 0
  %654 = vmatpush1.bf16.msra.mxu0 %v490
  %655 = vmatprep.subr.bf16.mxu0 0
  %656 = vmatpush1.bf16.msra.mxu0 %v491
  %657 = vmatprep.subr.bf16.mxu0 0
  %658 = vmatpush1.bf16.msra.mxu0 %v492
  %659 = vmatprep.subr.bf16.mxu0 0
  %660 = vmatpush1.bf16.msra.mxu0 %v493
  %661 = vmatprep.subr.bf16.mxu0 0
  %662 = vmatpush1.bf16.msra.mxu0 %v494
  %663 = vmatprep.mubr.bf16.mxu0 %v67
  %664 = vmatmul.mubr.bf16.gmra.mrb[0].mxu0 %v66
  %v665 = vpop.f32.mrb[0].mxu0
  %v666 = vadd.f32 %v626, %v665
  %v667 = vpop.f32.mrb[0].mxu0
  %v668 = vpop.f32.mrb[0].mxu0
  %v669 = vpop.f32.mrb[0].mxu0
  %670 = vdwg.mxu0
  %671 = vmatprep.subr.bf16.mxu0 0
  %672 = vmatpush1.bf16.msra.mxu0 %v495
  %673 = vmatprep.subr.bf16.mxu0 0
  %674 = vmatpush1.bf16.msra.mxu0 %v496
  %675 = vmatprep.subr.bf16.mxu0 0
  %676 = vmatpush1.bf16.msra.mxu0 %v497
  %677 = vmatprep.subr.bf16.mxu0 0
  %678 = vmatpush1.bf16.msra.mxu0 %v498
  %679 = vmatprep.subr.bf16.mxu0 0
  %680 = vmatpush1.bf16.msra.mxu0 %v499
  %681 = vmatprep.subr.bf16.mxu0 0
  %682 = vmatpush1.bf16.msra.mxu0 %v500
  %683 = vmatprep.subr.bf16.mxu0 0
  %684 = vmatpush1.bf16.msra.mxu0 %v501
  %685 = vmatprep.subr.bf16.mxu0 0
  %686 = vmatpush1.bf16.msra.mxu0 %v502
  %687 = vmatprep.subr.bf16.mxu0 0
  %688 = vmatpush1.bf16.msra.mxu0 %v503
  %689 = vmatprep.subr.bf16.mxu0 0
  %690 = vmatpush1.bf16.msra.mxu0 %v504
  %691 = vmatprep.subr.bf16.mxu0 0
  %692 = vmatpush1.bf16.msra.mxu0 %v505
  %693 = vmatprep.subr.bf16.mxu0 0
  %694 = vmatpush1.bf16.msra.mxu0 %v506
  %695 = vmatprep.subr.bf16.mxu0 0
  %696 = vmatpush1.bf16.msra.mxu0 %v507
  %697 = vmatprep.subr.bf16.mxu0 0
  %698 = vmatpush1.bf16.msra.mxu0 %v508
  %699 = vmatprep.subr.bf16.mxu0 0
  %700 = vmatpush1.bf16.msra.mxu0 %v509
  %701 = vmatprep.subr.bf16.mxu0 0
  %702 = vmatpush1.bf16.msra.mxu0 %v510
  %703 = vmatprep.mubr.bf16.mxu0 %v69
  %704 = vmatmul.mubr.bf16.gmra.mrb[0].mxu0 %v68
  %v705 = vpop.f32.mrb[0].mxu0
  %v706 = vadd.f32 %v666, %v705
  %v707 = vpop.f32.mrb[0].mxu0
  %v708 = vpop.f32.mrb[0].mxu0
  %v709 = vpop.f32.mrb[0].mxu0
  %710 = vdwg.mxu0
  %711 = vmatprep.subr.bf16.mxu0 0
  %712 = vmatpush1.bf16.msra.mxu0 %v511
  %713 = vmatprep.subr.bf16.mxu0 0
  %714 = vmatpush1.bf16.msra.mxu0 %v512
  %715 = vmatprep.subr.bf16.mxu0 0
  %716 = vmatpush1.bf16.msra.mxu0 %v513
  %717 = vmatprep.subr.bf16.mxu0 0
  %718 = vmatpush1.bf16.msra.mxu0 %v514
  %719 = vmatprep.subr.bf16.mxu0 0
  %720 = vmatpush1.bf16.msra.mxu0 %v515
  %721 = vmatprep.subr.bf16.mxu0 0
  %722 = vmatpush1.bf16.msra.mxu0 %v516
  %723 = vmatprep.subr.bf16.mxu0 0
  %724 = vmatpush1.bf16.msra.mxu0 %v517
  %725 = vmatprep.subr.bf16.mxu0 0
  %726 = vmatpush1.bf16.msra.mxu0 %v518
  %727 = vmatprep.subr.bf16.mxu0 0
  %728 = vmatpush1.bf16.msra.mxu0 %v519
  %729 = vmatprep.subr.bf16.mxu0 0
  %730 = vmatpush1.bf16.msra.mxu0 %v520
  %731 = vmatprep.subr.bf16.mxu0 0
  %732 = vmatpush1.bf16.msra.mxu0 %v521
  %733 = vmatprep.subr.bf16.mxu0 0
  %734 = vmatpush1.bf16.msra.mxu0 %v522
  %735 = vmatprep.subr.bf16.mxu0 0
  %736 = vmatpush1.bf16.msra.mxu0 %v523
  %737 = vmatprep.subr.bf16.mxu0 0
  %738 = vmatpush1.bf16.msra.mxu0 %v524
  %739 = vmatprep.subr.bf16.mxu0 0
  %740 = vmatpush1.bf16.msra.mxu0 %v525
  %741 = vmatprep.subr.bf16.mxu0 0
  %742 = vmatpush1.bf16.msra.mxu0 %v526
  %743 = vmatprep.mubr.bf16.mxu0 %v71
  %744 = vmatmul.mubr.bf16.gmra.mrb[0].mxu0 %v70
  %v745 = vpop.f32.mrb[0].mxu0
  %v746 = vadd.f32 %v706, %v745
  %v747 = vpop.f32.mrb[0].mxu0
  %v748 = vpop.f32.mrb[0].mxu0
  %v749 = vpop.f32.mrb[0].mxu0
  %750 = vdwg.mxu0
  %v751 = vmul.f32 %v746, %v746
  %v752 = vld [vmem:[%s3] sm:$0xff]
  %v753 = vld [vmem:[%s3 + $0x8] sm:$0xff]
  %v754 = vld [vmem:[%s3 + $0x10] sm:$0xff]
  %v755 = vld [vmem:[%s3 + $0x18] sm:$0xff]
  %v756 = vld [vmem:[%s3 + $0x20] sm:$0xff]
  %v757 = vld [vmem:[%s3 + $0x28] sm:$0xff]
  %v758 = vld [vmem:[%s3 + $0x30] sm:$0xff]
  %v759 = vld [vmem:[%s3 + $0x38] sm:$0xff]
  %v760 = vld [vmem:[%s3 + $0x40] sm:$0xff]
  %v761 = vld [vmem:[%s3 + $0x48] sm:$0xff]
  %v762 = vld [vmem:[%s3 + $0x50] sm:$0xff]
  %v763 = vld [vmem:[%s3 + $0x58] sm:$0xff]
  %v764 = vld [vmem:[%s3 + $0x60] sm:$0xff]
  %v765 = vld [vmem:[%s3 + $0x68] sm:$0xff]
  %v766 = vld [vmem:[%s3 + $0x70] sm:$0xff]
  %v767 = vld [vmem:[%s3 + $0x78] sm:$0xff]
  %768 = vmatprep.subr.mxu0 0.0
  %769 = vmatpush1.msra.mxu0 %v752
  %770 = vmatprep.subr.mxu0 0.0
  %771 = vmatpush1.msra.mxu0 %v753
  %772 = vmatprep.subr.mxu0 0.0
  %773 = vmatpush1.msra.mxu0 %v754
  %774 = vmatprep.subr.mxu0 0.0
  %775 = vmatpush1.msra.mxu0 %v755
  %776 = vmatprep.subr.mxu0 0.0
  %777 = vmatpush1.msra.mxu0 %v756
  %778 = vmatprep.subr.mxu0 0.0
  %779 = vmatpush1.msra.mxu0 %v757
  %780 = vmatprep.subr.mxu0 0.0
  %781 = vmatpush1.msra.mxu0 %v758
  %782 = vmatprep.subr.mxu0 0.0
  %783 = vmatpush1.msra.mxu0 %v759
  %784 = vmatprep.subr.mxu0 0.0
  %785 = vmatpush1.msra.mxu0 %v760
  %786 = vmatprep.subr.mxu0 0.0
  %787 = vmatpush1.msra.mxu0 %v761
  %788 = vmatprep.subr.mxu0 0.0
  %789 = vmatpush1.msra.mxu0 %v762
  %790 = vmatprep.subr.mxu0 0.0
  %791 = vmatpush1.msra.mxu0 %v763
  %792 = vmatprep.subr.mxu0 0.0
  %793 = vmatpush1.msra.mxu0 %v764
  %794 = vmatprep.subr.mxu0 0.0
  %795 = vmatpush1.msra.mxu0 %v765
  %796 = vmatprep.subr.mxu0 0.0
  %797 = vmatpush1.msra.mxu0 %v766
  %798 = vmatprep.subr.mxu0 0.0
  %799 = vmatpush1.msra.mxu0 %v767
  %800 = vmatprep.subr.mxu0 0.0
  %801 = vmatpush1.msra.mxu0 0.0
  %802 = vmatprep.subr.mxu0 0.0
  %803 = vmatpush1.msra.mxu0 0.0
  %804 = vmatprep.subr.mxu0 0.0
  %805 = vmatpush1.msra.mxu0 0.0
  %806 = vmatprep.subr.mxu0 0.0
  %807 = vmatpush1.msra.mxu0 0.0
  %808 = vmatprep.subr.mxu0 0.0
  %809 = vmatpush1.msra.mxu0 0.0
  %810 = vmatprep.subr.mxu0 0.0
  %811 = vmatpush1.msra.mxu0 0.0
  %812 = vmatprep.subr.mxu0 0.0
  %813 = vmatpush1.msra.mxu0 0.0
  %814 = vmatprep.subr.mxu0 0.0
  %815 = vmatpush1.msra.mxu0 0.0
  %816 = vmatprep.subr.mxu0 0.0
  %817 = vmatpush1.msra.mxu0 0.0
  %818 = vmatprep.subr.mxu0 0.0
  %819 = vmatpush1.msra.mxu0 0.0
  %820 = vmatprep.subr.mxu0 0.0
  %821 = vmatpush1.msra.mxu0 0.0
  %822 = vmatprep.subr.mxu0 0.0
  %823 = vmatpush1.msra.mxu0 0.0
  %824 = vmatprep.subr.mxu0 0.0
  %825 = vmatpush1.msra.mxu0 0.0
  %826 = vmatprep.subr.mxu0 0.0
  %827 = vmatpush1.msra.mxu0 0.0
  %828 = vmatprep.subr.mxu0 0.0
  %829 = vmatpush1.msra.mxu0 0.0
  %830 = vmatprep.subr.mxu0 0.0
  %831 = vmatpush1.msra.mxu0 0.0
  %832 = vmatprep.mubr.f32.mxu0 0.0
  %833 = vmatmul.mubr.f32.gmra.mrb[0].mxu0 %v751
  %v834 = vpop.f32.mrb[0].mxu0
  %v835 = vadd.f32 0.0, %v834
  %v836 = vpop.f32.mrb[0].mxu0
  %837 = vdwg.mxu0
  %v838 = vmax.f32 %v835, 1e-24
  %v839 = vrsqrt.pop %v838
  %v840 = vmul.f32 %v746, %v839
  %841 = vst [vmem:[%s4] sm:$0x3] %v840
  // Predicated region
  $region18: #{network_forward.3} parent=0 // pred_check
    _
  $region19: #{network_forward.3} parent=0 // pred_check_branch
    %843 = sbr.rel (0) target = $region21
  $region20: #{network_forward.3} parent=0 // pred_region
    _
  $region21: #{network_forward.3} parent=0 // pred_fallthru
    _
  // Predicated region
  $region22: #{network_forward.3} parent=0 // pred_check
    _
  $region23: #{network_forward.3} parent=0 // pred_check_branch
    %845 = sbr.rel (0) target = $region25
  $region24: #{network_forward.3} parent=0 // pred_region
    _
  $region25: #{network_forward.3} parent=0 // pred_fallthru
    _

</llo_original>
